<compile_context>
chip_gen: v5e
topology: v5e:2x2
jax: 0.10.0
libtpu: 0.0.40
codegen_flags: <defaults>
</compile_context>

<pallas_src>
import math

import jax
import jax.numpy as jnp
from jax import lax
from jax.experimental import pallas as pl
from jax.experimental.pallas import tpu as pltpu


def mlp_ds_kernel(x_ref, w1_ref, b1_ref, w2_ref, b2_ref, o_ref):
    # x_ref : (B, in_feas)       f32  (VMEM resident across the whole grid)
    # w1_ref: (in_feas, TN)      f32  tile of the (in, hid) encoder weight
    # b1_ref: (1, TN)            f32  tile of the encoder bias
    # w2_ref: (out_feas, TN)     f32  lane-dense tile of the (out, hid) fc weight
    # b2_ref: (1, out_feas)      f32  fc bias
    # o_ref : (B, out_feas)      f32  accumulator (same block for every grid step)
    i = pl.program_id(0)

    @pl.when(i == 0)
    def _init():
        # Start the accumulator from the fc bias (broadcast over the batch).
        o_ref[...] = jnp.broadcast_to(b2_ref[...], o_ref.shape).astype(o_ref.dtype)

    # First linear layer on this hidden tile: (B, in) @ (in, TN) + b1 -> (B, TN).
    h = jnp.dot(x_ref[...], w1_ref[...], preferred_element_type=jnp.float32)
    h = h + b1_ref[...]

    # Second linear layer, contracting the hidden (TN) axis of both operands:
    # h @ w2.T -> (B, out_feas) partial sum for this hidden tile.
    y = lax.dot_general(
        h,
        w2_ref[...],
        dimension_numbers=(((1,), (1,)), ((), ())),
        preferred_element_type=jnp.float32,
    )
    o_ref[...] += y


def make_mlp_ds_params(w1, b1, w2, b2):
    """One-time parameter prep (NOT per forward call).

    PyTorch layout in: w1 (hid, in), b1 (hid,), w2 (out, hid), b2 (out,).
    """
    w1_t = jnp.asarray(w1, jnp.float32).T                # (in, hid)
    b1_2d = jnp.asarray(b1, jnp.float32).reshape(1, -1)  # (1, hid)
    w2_l = jnp.asarray(w2, jnp.float32)                  # (out, hid), lane-dense
    b2_2d = jnp.asarray(b2, jnp.float32).reshape(1, -1)  # (1, out)
    return w1_t, b1_2d, w2_l, b2_2d


def mlp_ds_forward(x_nchw, w1_t, b1_2d, w2_l, b2_2d, *, tile_n=512):
    """Forward pass: Flatten -> Linear(in, hid) -> Linear(hid, out)."""
    B = x_nchw.shape[0]
    in_feas = math.prod(x_nchw.shape[1:])
    hid = w1_t.shape[1]
    out_feas = w2_l.shape[0]

    tile_n = min(tile_n, hid)
    assert hid % tile_n == 0, (hid, tile_n)
    num_tiles = hid // tile_n

    # Glue: row-major flatten, identical to torch.nn.Flatten on NCHW input.
    x2d = x_nchw.reshape(B, in_feas).astype(jnp.float32)

    grid_spec = pltpu.PrefetchScalarGridSpec(
        num_scalar_prefetch=0,
        grid=(num_tiles,),
        in_specs=[
            pl.BlockSpec((B, in_feas), lambda i: (0, 0)),        # x, tiny, resident
            pl.BlockSpec((in_feas, tile_n), lambda i: (0, i)),   # w1 tile (dominant DMA)
            pl.BlockSpec((1, tile_n), lambda i: (0, i)),         # b1 tile
            pl.BlockSpec((out_feas, tile_n), lambda i: (0, i)),  # w2 tile (lane-dense)
            pl.BlockSpec((1, out_feas), lambda i: (0, 0)),       # b2, tiny, resident
        ],
        out_specs=pl.BlockSpec((B, out_feas), lambda i: (0, 0)), # accumulator block
    )

    cost = pl.CostEstimate(
        flops=2 * B * (in_feas * hid + hid * out_feas),
        transcendentals=0,
        bytes_accessed=4 * (x2d.size + w1_t.size + b1_2d.size
                            + w2_l.size + b2_2d.size + B * out_feas),
    )

    return pl.pallas_call(
        mlp_ds_kernel,
        out_shape=jax.ShapeDtypeStruct((B, out_feas), jnp.float32),
        grid_spec=grid_spec,
        compiler_params=pltpu.CompilerParams(
            # The hidden axis is a reduction into a resident output block.
            dimension_semantics=("arbitrary",),
            # Footprint: double-buffered w1 tile (~3.2 MiB) + x + w2 tiles << 32 MiB,
            # which also leaves headroom on v7x's 64 MiB physical VMEM.
            vmem_limit_bytes=32 << 20,
        ),
        cost_estimate=cost,
    )(x2d, w1_t, b1_2d, w2_l, b2_2d)


if __name__ == "__main__":
    # MNIST-like shapes: X is (B, 1, 28, 28) -> in_feas = 784, out_feas = 10,
    # hid_num = 2048 (hard-coded in the module). Small batch for the demo.
    B, C, H, W = 8, 1, 28, 28
    in_feas = C * H * W          # 784
    hid = 2048
    out_feas = 10

    key = jax.random.PRNGKey(0)
    kx, kw1, kb1, kw2, kb2 = jax.random.split(key, 5)

    x = jax.random.normal(kx, (B, C, H, W), dtype=jnp.float32)

    # Deterministic parameter init mirroring PyTorch Linear defaults:
    # U(-1/sqrt(fan_in), 1/sqrt(fan_in)), weights stored as (out, in).
    bound1 = 1.0 / (in_feas ** 0.5)
    w1 = jax.random.uniform(kw1, (hid, in_feas), jnp.float32, -bound1, bound1)
    b1 = jax.random.uniform(kb1, (hid,), jnp.float32, -bound1, bound1)
    bound2 = 1.0 / (hid ** 0.5)
    w2 = jax.random.uniform(kw2, (out_feas, hid), jnp.float32, -bound2, bound2)
    b2 = jax.random.uniform(kb2, (out_feas,), jnp.float32, -bound2, bound2)

    # Parameter prep happens ONCE, outside the hot path (no per-call transpose).
    params = make_mlp_ds_params(w1, b1, w2, b2)

    fwd = jax.jit(mlp_ds_forward)
    out = jax.block_until_ready(fwd(x, *params))

    # Full-f32 PyTorch-equivalent reference.
    x_flat = x.reshape(B, in_feas)
    ref_h = jnp.dot(x_flat, w1.T, precision=lax.Precision.HIGHEST) + b1
    ref = jnp.dot(ref_h, w2.T, precision=lax.Precision.HIGHEST) + b2

    assert out.shape == (B, out_feas), out.shape
    max_err = float(jnp.max(jnp.abs(out - ref)))
    assert jnp.allclose(out, ref, atol=5e-3, rtol=5e-3), max_err
    print("KERNEL_OK")
</pallas_src>

<mosaic_0001>
module attributes {stable_mosaic.version = 11 : i64} {
  func.func @mlp_ds_kernel(%arg0: i32, %arg1: memref<8x784xf32, #tpu.memory_space<vmem>>, %arg2: memref<784x512xf32, #tpu.memory_space<vmem>>, %arg3: memref<1x512xf32, #tpu.memory_space<vmem>>, %arg4: memref<10x512xf32, #tpu.memory_space<vmem>>, %arg5: memref<1x10xf32, #tpu.memory_space<vmem>>, %arg6: memref<8x10xf32, #tpu.memory_space<vmem>>) attributes {dimension_semantics = [#tpu.dimension_semantics<arbitrary>], iteration_bounds = array<i64: 4>, scalar_prefetch = 0 : i64, scratch_operands = 0 : i64, tpu.core_type = #tpu.core_type<tc>, window_params = [{pipeline_mode = #tpu.pipeline_mode<synchronous>, transform_indices = @transform_0, window_bounds = array<i64: 8, 784>}, {transform_indices = @transform_1, window_bounds = array<i64: 784, 512>}, {transform_indices = @transform_2, window_bounds = array<i64: 1, 512>}, {transform_indices = @transform_3, window_bounds = array<i64: 10, 512>}, {pipeline_mode = #tpu.pipeline_mode<synchronous>, transform_indices = @transform_4, window_bounds = array<i64: 1, 10>}, {pipeline_mode = #tpu.pipeline_mode<synchronous>, transform_indices = @transform_5, window_bounds = array<i64: 8, 10>}]} {
    %c0_i32 = arith.constant 0 : i32
    %0 = arith.cmpi eq, %arg0, %c0_i32 : i32
    %1 = arith.extui %0 : i1 to i32
    %c0_i32_0 = arith.constant 0 : i32
    %2 = arith.cmpi ne, %1, %c0_i32_0 : i32
    scf.if %2 {
      %c0_13 = arith.constant 0 : index
      %c0_14 = arith.constant 0 : index
      %14 = vector.load %arg5[%c0_13, %c0_14] : memref<1x10xf32, #tpu.memory_space<vmem>>, vector<1x10xf32>
      %15 = vector.shape_cast %14 : vector<1x10xf32> to vector<1x10xf32>
      %16 = vector.broadcast %15 : vector<1x10xf32> to vector<8x10xf32>
      %c0_15 = arith.constant 0 : index
      %c0_16 = arith.constant 0 : index
      %17 = vector.load %arg6[%c0_15, %c0_16] : memref<8x10xf32, #tpu.memory_space<vmem>>, vector<8x10xf32>
      tpu.vector_store %arg6[%c0_15, %c0_16], %16 {strides = array<i32>} : memref<8x10xf32, #tpu.memory_space<vmem>>, vector<8x10xf32>,
    } else {
    }
    %c0 = arith.constant 0 : index
    %c0_1 = arith.constant 0 : index
    %3 = vector.load %arg1[%c0, %c0_1] : memref<8x784xf32, #tpu.memory_space<vmem>>, vector<8x784xf32>
    %c0_2 = arith.constant 0 : index
    %c0_3 = arith.constant 0 : index
    %4 = vector.load %arg2[%c0_2, %c0_3] : memref<784x512xf32, #tpu.memory_space<vmem>>, vector<784x512xf32>
    %cst = arith.constant dense<0.000000e+00> : vector<8x512xf32>
    %5 = tpu.matmul %3, %4, %cst {dimension_numbers = #tpu.dot_dimension_numbers<[1], [0], [0], [1], [0, 0, 1, 1], [], []>} : vector<8x784xf32>, vector<784x512xf32>, vector<8x512xf32> -> vector<8x512xf32>
    %c0_4 = arith.constant 0 : index
    %c0_5 = arith.constant 0 : index
    %6 = vector.load %arg3[%c0_4, %c0_5] : memref<1x512xf32, #tpu.memory_space<vmem>>, vector<1x512xf32>
    %7 = vector.broadcast %6 : vector<1x512xf32> to vector<8x512xf32>
    %8 = arith.addf %5, %7 : vector<8x512xf32>
    %c0_6 = arith.constant 0 : index
    %c0_7 = arith.constant 0 : index
    %9 = vector.load %arg4[%c0_6, %c0_7] : memref<10x512xf32, #tpu.memory_space<vmem>>, vector<10x512xf32>
    %cst_8 = arith.constant dense<0.000000e+00> : vector<8x10xf32>
    %10 = tpu.matmul %8, %9, %cst_8 {dimension_numbers = #tpu.dot_dimension_numbers<[1], [1], [0], [0], [0, 0, 1, 0], [], []>} : vector<8x512xf32>, vector<10x512xf32>, vector<8x10xf32> -> vector<8x10xf32>
    %c0_9 = arith.constant 0 : index
    %c0_10 = arith.constant 0 : index
    %11 = vector.load %arg6[%c0_9, %c0_10] : memref<8x10xf32, #tpu.memory_space<vmem>>, vector<8x10xf32>
    %12 = arith.addf %11, %10 : vector<8x10xf32>
    %c0_11 = arith.constant 0 : index
    %c0_12 = arith.constant 0 : index
    %13 = vector.load %arg6[%c0_11, %c0_12] : memref<8x10xf32, #tpu.memory_space<vmem>>, vector<8x10xf32>
    tpu.vector_store %arg6[%c0_11, %c0_12], %12 {strides = array<i32>} : memref<8x10xf32, #tpu.memory_space<vmem>>, vector<8x10xf32>,
    return
  }
  func.func @transform_0(%arg0: i32) -> (i32, i32) {
    %c0_i32 = arith.constant 0 : i32
    %c0_i32_0 = arith.constant 0 : i32
    %c0_i32_1 = arith.constant 0 : i32
    return %c0_i32, %c0_i32_0 : i32, i32
  }
  func.func @transform_1(%arg0: i32) -> (i32, i32) {
    %c0_i32 = arith.constant 0 : i32
    %c0_i32_0 = arith.constant 0 : i32
    return %c0_i32, %arg0 : i32, i32
  }
  func.func @transform_2(%arg0: i32) -> (i32, i32) {
    %c0_i32 = arith.constant 0 : i32
    %c0_i32_0 = arith.constant 0 : i32
    return %c0_i32, %arg0 : i32, i32
  }
  func.func @transform_3(%arg0: i32) -> (i32, i32) {
    %c0_i32 = arith.constant 0 : i32
    %c0_i32_0 = arith.constant 0 : i32
    return %c0_i32, %arg0 : i32, i32
  }
  func.func @transform_4(%arg0: i32) -> (i32, i32) {
    %c0_i32 = arith.constant 0 : i32
    %c0_i32_0 = arith.constant 0 : i32
    %c0_i32_1 = arith.constant 0 : i32
    return %c0_i32, %c0_i32_0 : i32, i32
  }
  func.func @transform_5(%arg0: i32) -> (i32, i32) {
    %c0_i32 = arith.constant 0 : i32
    %c0_i32_0 = arith.constant 0 : i32
    %c0_i32_1 = arith.constant 0 : i32
    return %c0_i32, %c0_i32_0 : i32, i32
  }
}

</mosaic_0001>

<llo_original>
// kernel: mlp_ds_forward.1
$region0: #{mlp_ds_forward.1}
  #allocation0 [shape = 'u32[]', space=smem, size = 0x4, offset = 0x4, fixed_abs, tag = 'smem constant byte address 0x4 - core index']
  #allocation1 [shape = 'u32[72,128]{1,0:T(1,128)}', space=vmem, size = 0x9000, scoped, tag = 'internal scratch']
  %s0 = inlined_call_operand.vmem [shape: f32[8,784], index: 0, kind: input, shape index: {}]
  %s1 = inlined_call_operand.hbm [shape: f32[784,2048], index: 1, kind: input, shape index: {}]
  %s2 = inlined_call_operand.hbm [shape: f32[1,2048], index: 2, kind: input, shape index: {}]
  %s3 = inlined_call_operand.hbm [shape: f32[10,2048], index: 3, kind: input, shape index: {}]
  %s4 = inlined_call_operand.hbm [shape: f32[1,10], index: 4, kind: input, shape index: {}]
  %s5 = inlined_call_operand.hbm [shape: f32[8,10], index: 5, kind: output, shape index: {}]
  %s6 = sld [smem:[#allocation0]]
  $region73: #{mlp_ds_forward.1} parent=0
    _
  %s8 = ssub.s32 1, %s6
  %s9 = scalar_select 0, %s8, %s6
  $region1: #{mlp_ds_forward.1} parent=0
    #allocation2 [shape = 'u8[3211264]{0}', space=vmem, size = 0x310000, scoped, tag = 'input window, operand 1']
    #allocation3 [shape = 's32[2]{0}', space=sflag, size = 0x8, scoped, tag = 'scoped memory for mlp_ds_forward.1']
    #allocation4 [shape = 's32[2]{0}', space=sflag, size = 0x8, scoped, tag = 'scoped memory for mlp_ds_forward.1']
    #allocation5 [shape = 'u8[4096]{0}', space=vmem, size = 0x1000, scoped, tag = 'input window, operand 2']
    #allocation6 [shape = 's32[2]{0}', space=sflag, size = 0x8, scoped, tag = 'scoped memory for mlp_ds_forward.1']
    #allocation7 [shape = 'u8[65536]{0}', space=vmem, size = 0x10000, scoped, tag = 'input window, operand 3']
    #allocation8 [shape = 'u8[512]{0}', space=vmem, size = 0x400, scoped, tag = 'input window, operand 4, single buffered']
    #allocation9 [shape = 's32[1]{0}', space=sflag, size = 0x4, scoped, tag = 'scoped memory for mlp_ds_forward.1']
    #allocation10 [shape = 'u8[4096]{0}', space=vmem, size = 0x1000, scoped, tag = 'output window, operand 0, single buffered']
    %10 = vsyncpa [#allocation3], 0
    %s11 = scalar_lea.sflag [#allocation3], 1
    %12 = vsyncpa %s11, 0
    %13 = vsyncpa [#allocation6], 0
    %s14 = scalar_lea.sflag [#allocation6], 1
    %15 = vsyncpa %s14, 0
    %16 = vsyncpa [#allocation9], 0
    %17 = vsyncpa [#allocation4], 0
    loop: start=0, step=1, limit=6
    $region2: #{mlp_ds_forward.1} parent=1 // loop_pre_header
      _
    $region3: #{mlp_ds_forward.1} parent=1 // loop_header
      %s19 = sphi 0, %s23
      %p20 = scmp.ge.s32.totalorder %s19, 6
      %s27 = sphi 0, %s27
      %s29 = sphi 0, %s27
      %s30 = sphi 0, %s29
      %s44 = sphi 0, %s30
      %s50 = sphi 0, %s52
      %s53 = sphi 0, %s50
      %s54 = sphi 0, %s53
      %s70 = sphi 0, %s54
      %s76 = sphi 0, %s78
      %s79 = sphi 0, %s76
      %s80 = sphi 0, %s79
      %s96 = sphi 0, %s80
      %s102 = sphi 0, %s104
      %s105 = sphi 0, %s102
      %s106 = sphi 0, %s105
      %s122 = sphi 0, %s106
      %s126 = sphi 0, %s126
      %s128 = sphi 0, %s126
      %s129 = sphi 0, %s128
      %s143 = sphi 0, %s129
      %s147 = sphi 0, %s147
      %s149 = sphi 0, %s147
      %s150 = sphi 0, %s149
      %s164 = sphi 0, %s150
    $region4: #{mlp_ds_forward.1} parent=1 // loop_header_branch
      %22 = sbr.rel (%p20) target = $region8
    $region5: #{mlp_ds_forward.1} parent=1 // loop_body
      %s24 = ssub.s32 %s19, 1
      %s25 = ssub.s32 %s19, 2
      %s26 = sadd.s32 %s19, 1
      %s28 = sadd.s32 %s27, 1
      %p31 = scmp.eq.s32.totalorder %s19, 3
      %p32 = scmp.ne.s32.totalorder %s27, %s29
      %p33 = scmp.eq.s32.totalorder %s19, 0
      %p34 = por %p32, %p33
      %p35 = scmp.ne.s32.totalorder %s27, %s29
      %p36 = scmp.eq.s32.totalorder %s24, 3
      %p37 = por %p35, %p36
      %p38 = scmp.ne.s32.totalorder %s29, %s30
      %p39 = scmp.eq.s32.totalorder %s24, 0
      %p40 = por %p38, %p39
      %p41 = scmp.ne.s32.totalorder %s29, %s30
      %p42 = scmp.eq.s32.totalorder %s25, 3
      %p43 = por %p41, %p42
      %p45 = scmp.ne.s32.totalorder %s30, %s44
      %p46 = scmp.eq.s32.totalorder %s25, 0
      %p47 = por %p45, %p46
      %s48 = ssub.s32 %s19, %s26
      %p49 = scmp.eq.s32.totalorder %s48, 0
      %s51 = sadd.s32 %s50, 1
      %s52 = scalar_select %p49, %s50, %s51
      %p55 = pneg %p49
      %p56 = scmp.eq.s32.totalorder %s19, 3
      %p57 = por %p55, %p56
      %p58 = scmp.ne.s32.totalorder %s50, %s53
      %p59 = scmp.eq.s32.totalorder %s19, 0
      %p60 = por %p58, %p59
      %p61 = scmp.ne.s32.totalorder %s50, %s53
      %p62 = scmp.eq.s32.totalorder %s24, 3
      %p63 = por %p61, %p62
      %p64 = scmp.ne.s32.totalorder %s53, %s54
      %p65 = scmp.eq.s32.totalorder %s24, 0
      %p66 = por %p64, %p65
      %p67 = scmp.ne.s32.totalorder %s53, %s54
      %p68 = scmp.eq.s32.totalorder %s25, 3
      %p69 = por %p67, %p68
      %p71 = scmp.ne.s32.totalorder %s54, %s70
      %p72 = scmp.eq.s32.totalorder %s25, 0
      %p73 = por %p71, %p72
      %s74 = ssub.s32 %s19, %s26
      %p75 = scmp.eq.s32.totalorder %s74, 0
      %s77 = sadd.s32 %s76, 1
      %s78 = scalar_select %p75, %s76, %s77
      %p81 = pneg %p75
      %p82 = scmp.eq.s32.totalorder %s19, 3
      %p83 = por %p81, %p82
      %p84 = scmp.ne.s32.totalorder %s76, %s79
      %p85 = scmp.eq.s32.totalorder %s19, 0
      %p86 = por %p84, %p85
      %p87 = scmp.ne.s32.totalorder %s76, %s79
      %p88 = scmp.eq.s32.totalorder %s24, 3
      %p89 = por %p87, %p88
      %p90 = scmp.ne.s32.totalorder %s79, %s80
      %p91 = scmp.eq.s32.totalorder %s24, 0
      %p92 = por %p90, %p91
      %p93 = scmp.ne.s32.totalorder %s79, %s80
      %p94 = scmp.eq.s32.totalorder %s25, 3
      %p95 = por %p93, %p94
      %p97 = scmp.ne.s32.totalorder %s80, %s96
      %p98 = scmp.eq.s32.totalorder %s25, 0
      %p99 = por %p97, %p98
      %s100 = ssub.s32 %s19, %s26
      %p101 = scmp.eq.s32.totalorder %s100, 0
      %s103 = sadd.s32 %s102, 1
      %s104 = scalar_select %p101, %s102, %s103
      %p107 = pneg %p101
      %p108 = scmp.eq.s32.totalorder %s19, 3
      %p109 = por %p107, %p108
      %p110 = scmp.ne.s32.totalorder %s102, %s105
      %p111 = scmp.eq.s32.totalorder %s19, 0
      %p112 = por %p110, %p111
      %p113 = scmp.ne.s32.totalorder %s102, %s105
      %p114 = scmp.eq.s32.totalorder %s24, 3
      %p115 = por %p113, %p114
      %p116 = scmp.ne.s32.totalorder %s105, %s106
      %p117 = scmp.eq.s32.totalorder %s24, 0
      %p118 = por %p116, %p117
      %p119 = scmp.ne.s32.totalorder %s105, %s106
      %p120 = scmp.eq.s32.totalorder %s25, 3
      %p121 = por %p119, %p120
      %p123 = scmp.ne.s32.totalorder %s106, %s122
      %p124 = scmp.eq.s32.totalorder %s25, 0
      %p125 = por %p123, %p124
      %s127 = sadd.s32 %s126, 1
      %p130 = scmp.eq.s32.totalorder %s19, 3
      %p131 = scmp.ne.s32.totalorder %s126, %s128
      %p132 = scmp.eq.s32.totalorder %s19, 0
      %p133 = por %p131, %p132
      %p134 = scmp.ne.s32.totalorder %s126, %s128
      %p135 = scmp.eq.s32.totalorder %s24, 3
      %p136 = por %p134, %p135
      %p137 = scmp.ne.s32.totalorder %s128, %s129
      %p138 = scmp.eq.s32.totalorder %s24, 0
      %p139 = por %p137, %p138
      %p140 = scmp.ne.s32.totalorder %s128, %s129
      %p141 = scmp.eq.s32.totalorder %s25, 3
      %p142 = por %p140, %p141
      %p144 = scmp.ne.s32.totalorder %s129, %s143
      %p145 = scmp.eq.s32.totalorder %s25, 0
      %p146 = por %p144, %p145
      %s148 = sadd.s32 %s147, 1
      %p151 = scmp.eq.s32.totalorder %s19, 3
      %p152 = scmp.ne.s32.totalorder %s147, %s149
      %p153 = scmp.eq.s32.totalorder %s19, 0
      %p154 = por %p152, %p153
      %p155 = scmp.ne.s32.totalorder %s147, %s149
      %p156 = scmp.eq.s32.totalorder %s24, 3
      %p157 = por %p155, %p156
      %p158 = scmp.ne.s32.totalorder %s149, %s150
      %p159 = scmp.eq.s32.totalorder %s24, 0
      %p160 = por %p158, %p159
      %p161 = scmp.ne.s32.totalorder %s149, %s150
      %p162 = scmp.eq.s32.totalorder %s25, 3
      %p163 = por %p161, %p162
      %p165 = scmp.ne.s32.totalorder %s150, %s164
      %p166 = scmp.eq.s32.totalorder %s25, 0
      %p167 = por %p165, %p166
      %p168 = scmp.le.s32.totalorder 1, %s19
      %p169 = scmp.lt.s32.totalorder %s19, 5
      %p170 = pnand %p168, %p169
      %p171 = pneg %p170
      // Predicated region
      $region9: #{mlp_ds_forward.1} parent=5 // pred_check
        _
      $region10: #{mlp_ds_forward.1} parent=5 // pred_check_branch
        %173 = sbr.rel (%p170) target = $region12
      $region11: #{mlp_ds_forward.1} parent=5 // pred_region
        %s174 = ssub.s32 %s19, 1
        // Predicated region
        $region13: #{mlp_ds_forward.1} parent=11 // pred_check
          %p175 = pneg %p40
        $region14: #{mlp_ds_forward.1} parent=11 // pred_check_branch
          %177 = sbr.rel (%p175) target = $region16
        $region15: #{mlp_ds_forward.1} parent=11 // pred_region
          _
        $region16: #{mlp_ds_forward.1} parent=11 // pred_fallthru
          _
        // Predicated region
        $region17: #{mlp_ds_forward.1} parent=11 // pred_check
          %p178 = pneg %p139
        $region18: #{mlp_ds_forward.1} parent=11 // pred_check_branch
          %180 = sbr.rel (%p178) target = $region20
        $region19: #{mlp_ds_forward.1} parent=11 // pred_region
          %182 = vsyncadd [#allocation9], 0
          %s184 = sshll.u32 %s4, 4
          %s185 = int_to_ptr.hbm [resolvable:$true] %s184
          %s186 = sshll.u32 [#allocation8], 4
          %s187 = int_to_ptr.vmem [resolvable:$true] %s186
          %189 = dma.hbm_to_vmem [thread:$0]  %s185, 16, %s187, [#allocation9]
        $region20: #{mlp_ds_forward.1} parent=11 // pred_fallthru
          _
      $region12: #{mlp_ds_forward.1} parent=5 // pred_fallthru
        _
      %p190 = scmp.lt.s32.totalorder %s19, 4
      // Predicated region
      $region21: #{mlp_ds_forward.1} parent=5 // pred_check
        %p191 = pneg %p190
      $region22: #{mlp_ds_forward.1} parent=5 // pred_check_branch
        %193 = sbr.rel (%p191) target = $region24
      $region23: #{mlp_ds_forward.1} parent=5 // pred_region
        // Predicated region
        $region25: #{mlp_ds_forward.1} parent=23 // pred_check
          %p194 = pneg %p60
        $region26: #{mlp_ds_forward.1} parent=23 // pred_check_branch
          %196 = sbr.rel (%p194) target = $region28
        $region27: #{mlp_ds_forward.1} parent=23 // pred_region
          %s197 = sand.u32 %s50, 1
          %s198 = scalar_lea.sflag [#allocation3], %s197
          %s199 = sand.u32 %s50, 1
          %s200 = smul.addr %s199, 3136
          %s201 = scalar_lea.vmem [#allocation2], %s200
          %s202 = smul.u32 4, %s19
          %204 = vsyncadd %s198, 0
          %s205 = smul.addr %s202, 8
          %s206 = scalar_lea.hbm %s1, %s205
          %s207 = sshll.u32 %s206, 4
          %s208 = int_to_ptr.hbm [resolvable:$true] %s207
          %s209 = sshll.u32 %s201, 4
          %s210 = int_to_ptr.vmem [resolvable:$true] %s209
          %215 = dma.hbm_to_vmem [thread:$0]  %s208, 50176, %s210, %s198, 2048, 512, 32
        $region28: #{mlp_ds_forward.1} parent=23 // pred_fallthru
          _
        // Predicated region
        $region29: #{mlp_ds_forward.1} parent=23 // pred_check
          %p216 = pneg %p86
        $region30: #{mlp_ds_forward.1} parent=23 // pred_check_branch
          %218 = sbr.rel (%p216) target = $region32
        $region31: #{mlp_ds_forward.1} parent=23 // pred_region
          %s219 = sand.u32 %s19, 1
          %s220 = scalar_lea.sflag [#allocation6], %s219
          %s221 = sand.u32 %s76, 1
          %s222 = smul.addr %s221, 4
          %s223 = scalar_lea.vmem [#allocation5], %s222
          %s224 = smul.u32 4, %s19
          %226 = vsyncadd %s220, 0
          %s227 = scalar_lea.hbm %s2, %s224
          %s229 = sshll.u32 %s227, 4
          %s230 = int_to_ptr.hbm [resolvable:$true] %s229
          %s231 = sshll.u32 %s223, 4
          %s232 = int_to_ptr.vmem [resolvable:$true] %s231
          %234 = dma.hbm_to_vmem [thread:$0]  %s230, 64, %s232, %s220
        $region32: #{mlp_ds_forward.1} parent=23 // pred_fallthru
          _
        // Predicated region
        $region33: #{mlp_ds_forward.1} parent=23 // pred_check
          %p235 = pneg %p112
        $region34: #{mlp_ds_forward.1} parent=23 // pred_check_branch
          %237 = sbr.rel (%p235) target = $region36
        $region35: #{mlp_ds_forward.1} parent=23 // pred_region
          %s238 = sand.u32 %s19, 1
          %s239 = scalar_lea.sflag [#allocation6], %s238
          %s240 = sand.u32 %s102, 1
          %s241 = smul.addr %s240, 64
          %s242 = scalar_lea.vmem [#allocation7], %s241
          %s243 = smul.u32 4, %s19
          %245 = vsyncadd %s239, 0
          %s246 = smul.addr %s243, 8
          %s247 = scalar_lea.hbm %s3, %s246
          %s248 = sshll.u32 %s247, 4
          %s249 = int_to_ptr.hbm [resolvable:$true] %s248
          %s250 = sshll.u32 %s242, 4
          %s251 = int_to_ptr.vmem [resolvable:$true] %s250
          %256 = dma.hbm_to_vmem [thread:$0]  %s249, 1024, %s251, %s239, 2048, 512, 32
        $region36: #{mlp_ds_forward.1} parent=23 // pred_fallthru
          _
      $region24: #{mlp_ds_forward.1} parent=5 // pred_fallthru
        _
      %p257 = scmp.le.s32.totalorder 1, %s19
      %p258 = scmp.lt.s32.totalorder %s19, 5
      %p259 = pnand %p257, %p258
      %p260 = pneg %p259
      // Predicated region
      $region37: #{mlp_ds_forward.1} parent=5 // pred_check
        _
      $region38: #{mlp_ds_forward.1} parent=5 // pred_check_branch
        %262 = sbr.rel (%p259) target = $region40
      $region39: #{mlp_ds_forward.1} parent=5 // pred_region
        %s263 = ssub.s32 %s19, 1
        %s264 = sand.u32 %s53, 1
        %s265 = scalar_lea.sflag [#allocation3], %s264
        %s266 = sand.u32 %s53, 1
        %s267 = smul.addr %s266, 3136
        %s268 = scalar_lea.vmem [#allocation2], %s267
        // Predicated region
        $region41: #{mlp_ds_forward.1} parent=39 // pred_check
          %p269 = pneg %p66
        $region42: #{mlp_ds_forward.1} parent=39 // pred_check_branch
          %271 = sbr.rel (%p269) target = $region44
        $region43: #{mlp_ds_forward.1} parent=39 // pred_region
          %273 = dma.done %s265, 50176
        $region44: #{mlp_ds_forward.1} parent=39 // pred_fallthru
          _
        %s274 = sand.u32 %s24, 1
        %s275 = scalar_lea.sflag [#allocation6], %s274
        %s276 = sand.u32 %s79, 1
        %s277 = smul.addr %s276, 4
        %s278 = scalar_lea.vmem [#allocation5], %s277
        // Predicated region
        $region45: #{mlp_ds_forward.1} parent=39 // pred_check
          %p279 = pneg %p92
        $region46: #{mlp_ds_forward.1} parent=39 // pred_check_branch
          %281 = sbr.rel (%p279) target = $region48
        $region47: #{mlp_ds_forward.1} parent=39 // pred_region
          %283 = dma.done %s275, 64
        $region48: #{mlp_ds_forward.1} parent=39 // pred_fallthru
          _
        %s284 = sand.u32 %s24, 1
        %s285 = scalar_lea.sflag [#allocation6], %s284
        %s286 = sand.u32 %s105, 1
        %s287 = smul.addr %s286, 64
        %s288 = scalar_lea.vmem [#allocation7], %s287
        // Predicated region
        $region49: #{mlp_ds_forward.1} parent=39 // pred_check
          %p289 = pneg %p118
        $region50: #{mlp_ds_forward.1} parent=39 // pred_check_branch
          %291 = sbr.rel (%p289) target = $region52
        $region51: #{mlp_ds_forward.1} parent=39 // pred_region
          %293 = dma.done %s285, 1024
        $region52: #{mlp_ds_forward.1} parent=39 // pred_fallthru
          _
        // Predicated region
        $region53: #{mlp_ds_forward.1} parent=39 // pred_check
          %p294 = pneg %p139
        $region54: #{mlp_ds_forward.1} parent=39 // pred_check_branch
          %296 = sbr.rel (%p294) target = $region56
        $region55: #{mlp_ds_forward.1} parent=39 // pred_region
          %298 = dma.done [#allocation9], 16
        $region56: #{mlp_ds_forward.1} parent=39 // pred_fallthru
          _
        %p299 = pneg %p40
        %p300 = pneg %p37
        %s301 = sand.u32 %s53, 1
        %s302 = scalar_lea.sflag [#allocation3], %s301
        %s303 = sand.u32 %s53, 1
        %s304 = smul.addr %s303, 3136
        %s305 = scalar_lea.vmem [#allocation2], %s304
        %p306 = pneg %p66
        %p307 = pneg %p63
        %s308 = sand.u32 %s24, 1
        %s309 = scalar_lea.sflag [#allocation6], %s308
        %s310 = sand.u32 %s79, 1
        %s311 = smul.addr %s310, 4
        %s312 = scalar_lea.vmem [#allocation5], %s311
        %p313 = pneg %p92
        %p314 = pneg %p89
        %s315 = sand.u32 %s24, 1
        %s316 = scalar_lea.sflag [#allocation6], %s315
        %s317 = sand.u32 %s105, 1
        %s318 = smul.addr %s317, 64
        %s319 = scalar_lea.vmem [#allocation7], %s318
        %p320 = pneg %p118
        %p321 = pneg %p115
        %p322 = pneg %p139
        %p323 = pneg %p136
        %p324 = pneg %p160
        %p325 = pneg %p157
        %s326 = smul.u32 4, %s24
        %s327 = smul.u32 4, %s24
        %s328 = smul.u32 4, %s24
        %p329 = scmp.eq.s32.totalorder %s24, 0
        // Predicated region
        $region57: #{mlp_ds_forward.1} parent=39 // pred_check
          %p330 = pneg %p329
        $region58: #{mlp_ds_forward.1} parent=39 // pred_check_branch
          %332 = sbr.rel (%p330) target = $region60
        $region59: #{mlp_ds_forward.1} parent=39 // pred_region
          %v333 = vld [vmem:[#allocation8] sm:$0x1]
          %v335 = vperm.slane %v333, 0
          %vm337 = vcmask 80896
          %338 = vst.msk [vmem:[#allocation10] sm:$0xff] %vm337, %v335
        $region60: #{mlp_ds_forward.1} parent=39 // pred_fallthru
          _
        %v339 = vld [vmem:[%s0] sm:$0xff]
        %v340 = vld [vmem:[%s0 + $0x8] sm:$0xff]
        %v341 = vld [vmem:[%s0 + $0x10] sm:$0xff]
        %v342 = vld [vmem:[%s0 + $0x18] sm:$0xff]
        %v343 = vld [vmem:[%s0 + $0x20] sm:$0xff]
        %v344 = vld [vmem:[%s0 + $0x28] sm:$0xff]
        %v345 = vld [vmem:[%s0 + $0x30] sm:$0xff]
        %v346 = vld [vmem:[%s268] sm:$0xff]
        %v347 = vld [vmem:[%s268 + $0x8] sm:$0xff]
        %v348 = vld [vmem:[%s268 + $0x10] sm:$0xff]
        %v349 = vld [vmem:[%s268 + $0x18] sm:$0xff]
        %v350 = vld [vmem:[%s268 + $0x20] sm:$0xff]
        %v351 = vld [vmem:[%s268 + $0x28] sm:$0xff]
        %v352 = vld [vmem:[%s268 + $0x30] sm:$0xff]
        %v353 = vld [vmem:[%s268 + $0x38] sm:$0xff]
        %v354 = vld [vmem:[%s268 + $0x40] sm:$0xff]
        %v355 = vld [vmem:[%s268 + $0x48] sm:$0xff]
        %v356 = vld [vmem:[%s268 + $0x50] sm:$0xff]
        %v357 = vld [vmem:[%s268 + $0x58] sm:$0xff]
        %v358 = vld [vmem:[%s268 + $0x60] sm:$0xff]
        %v359 = vld [vmem:[%s268 + $0x68] sm:$0xff]
        %v360 = vld [vmem:[%s268 + $0x70] sm:$0xff]
        %v361 = vld [vmem:[%s268 + $0x78] sm:$0xff]
        %v362 = vld [vmem:[%s268 + $0x80] sm:$0xff]
        %v363 = vld [vmem:[%s268 + $0x88] sm:$0xff]
        %v364 = vld [vmem:[%s268 + $0x90] sm:$0xff]
        %v365 = vld [vmem:[%s268 + $0x98] sm:$0xff]
        %v366 = vld [vmem:[%s268 + $0xa0] sm:$0xff]
        %v367 = vld [vmem:[%s268 + $0xa8] sm:$0xff]
        %v368 = vld [vmem:[%s268 + $0xb0] sm:$0xff]
        %v369 = vld [vmem:[%s268 + $0xb8] sm:$0xff]
        %v370 = vld [vmem:[%s268 + $0xc0] sm:$0xff]
        %v371 = vld [vmem:[%s268 + $0xc8] sm:$0xff]
        %v372 = vld [vmem:[%s268 + $0xd0] sm:$0xff]
        %v373 = vld [vmem:[%s268 + $0xd8] sm:$0xff]
        %v374 = vld [vmem:[%s268 + $0xe0] sm:$0xff]
        %v375 = vld [vmem:[%s268 + $0xe8] sm:$0xff]
        %v376 = vld [vmem:[%s268 + $0xf0] sm:$0xff]
        %v377 = vld [vmem:[%s268 + $0xf8] sm:$0xff]
        %v378 = vld [vmem:[%s268 + $0x100] sm:$0xff]
        %v379 = vld [vmem:[%s268 + $0x108] sm:$0xff]
        %v380 = vld [vmem:[%s268 + $0x110] sm:$0xff]
        %v381 = vld [vmem:[%s268 + $0x118] sm:$0xff]
        %v382 = vld [vmem:[%s268 + $0x120] sm:$0xff]
        %v383 = vld [vmem:[%s268 + $0x128] sm:$0xff]
        %v384 = vld [vmem:[%s268 + $0x130] sm:$0xff]
        %v385 = vld [vmem:[%s268 + $0x138] sm:$0xff]
        %v386 = vld [vmem:[%s268 + $0x140] sm:$0xff]
        %v387 = vld [vmem:[%s268 + $0x148] sm:$0xff]
        %v388 = vld [vmem:[%s268 + $0x150] sm:$0xff]
        %v389 = vld [vmem:[%s268 + $0x158] sm:$0xff]
        %v390 = vld [vmem:[%s268 + $0x160] sm:$0xff]
        %v391 = vld [vmem:[%s268 + $0x168] sm:$0xff]
        %v392 = vld [vmem:[%s268 + $0x170] sm:$0xff]
        %v393 = vld [vmem:[%s268 + $0x178] sm:$0xff]
        %v394 = vld [vmem:[%s268 + $0x180] sm:$0xff]
        %v395 = vld [vmem:[%s268 + $0x188] sm:$0xff]
        %v396 = vld [vmem:[%s268 + $0x190] sm:$0xff]
        %v397 = vld [vmem:[%s268 + $0x198] sm:$0xff]
        %v398 = vld [vmem:[%s268 + $0x1a0] sm:$0xff]
        %v399 = vld [vmem:[%s268 + $0x1a8] sm:$0xff]
        %v400 = vld [vmem:[%s268 + $0x1b0] sm:$0xff]
        %v401 = vld [vmem:[%s268 + $0x1b8] sm:$0xff]
        %v402 = vld [vmem:[%s268 + $0x1c0] sm:$0xff]
        %v403 = vld [vmem:[%s268 + $0x1c8] sm:$0xff]
        %v404 = vld [vmem:[%s268 + $0x1d0] sm:$0xff]
        %v405 = vld [vmem:[%s268 + $0x1d8] sm:$0xff]
        %v406 = vld [vmem:[%s268 + $0x1e0] sm:$0xff]
        %v407 = vld [vmem:[%s268 + $0x1e8] sm:$0xff]
        %v408 = vld [vmem:[%s268 + $0x1f0] sm:$0xff]
        %v409 = vld [vmem:[%s268 + $0x1f8] sm:$0xff]
        %v410 = vld [vmem:[%s268 + $0x200] sm:$0xff]
        %v411 = vld [vmem:[%s268 + $0x208] sm:$0xff]
        %v412 = vld [vmem:[%s268 + $0x210] sm:$0xff]
        %v413 = vld [vmem:[%s268 + $0x218] sm:$0xff]
        %v414 = vld [vmem:[%s268 + $0x220] sm:$0xff]
        %v415 = vld [vmem:[%s268 + $0x228] sm:$0xff]
        %v416 = vld [vmem:[%s268 + $0x230] sm:$0xff]
        %v417 = vld [vmem:[%s268 + $0x238] sm:$0xff]
        %v418 = vld [vmem:[%s268 + $0x240] sm:$0xff]
        %v419 = vld [vmem:[%s268 + $0x248] sm:$0xff]
        %v420 = vld [vmem:[%s268 + $0x250] sm:$0xff]
        %v421 = vld [vmem:[%s268 + $0x258] sm:$0xff]
        %v422 = vld [vmem:[%s268 + $0x260] sm:$0xff]
        %v423 = vld [vmem:[%s268 + $0x268] sm:$0xff]
        %v424 = vld [vmem:[%s268 + $0x270] sm:$0xff]
        %v425 = vld [vmem:[%s268 + $0x278] sm:$0xff]
        %v426 = vld [vmem:[%s268 + $0x280] sm:$0xff]
        %v427 = vld [vmem:[%s268 + $0x288] sm:$0xff]
        %v428 = vld [vmem:[%s268 + $0x290] sm:$0xff]
        %v429 = vld [vmem:[%s268 + $0x298] sm:$0xff]
        %v430 = vld [vmem:[%s268 + $0x2a0] sm:$0xff]
        %v431 = vld [vmem:[%s268 + $0x2a8] sm:$0xff]
        %v432 = vld [vmem:[%s268 + $0x2b0] sm:$0xff]
        %v433 = vld [vmem:[%s268 + $0x2b8] sm:$0xff]
        %v434 = vld [vmem:[%s268 + $0x2c0] sm:$0xff]
        %v435 = vld [vmem:[%s268 + $0x2c8] sm:$0xff]
        %v436 = vld [vmem:[%s268 + $0x2d0] sm:$0xff]
        %v437 = vld [vmem:[%s268 + $0x2d8] sm:$0xff]
        %v438 = vld [vmem:[%s268 + $0x2e0] sm:$0xff]
        %v439 = vld [vmem:[%s268 + $0x2e8] sm:$0xff]
        %v440 = vld [vmem:[%s268 + $0x2f0] sm:$0xff]
        %v441 = vld [vmem:[%s268 + $0x2f8] sm:$0xff]
        %v442 = vld [vmem:[%s268 + $0x300] sm:$0xff]
        %v443 = vld [vmem:[%s268 + $0x308] sm:$0xff]
        %v444 = vld [vmem:[%s268 + $0x310] sm:$0xff]
        %v445 = vld [vmem:[%s268 + $0x318] sm:$0xff]
        %v446 = vld [vmem:[%s268 + $0x320] sm:$0xff]
        %v447 = vld [vmem:[%s268 + $0x328] sm:$0xff]
        %v448 = vld [vmem:[%s268 + $0x330] sm:$0xff]
        %v449 = vld [vmem:[%s268 + $0x338] sm:$0xff]
        %v450 = vld [vmem:[%s268 + $0x340] sm:$0xff]
        %v451 = vld [vmem:[%s268 + $0x348] sm:$0xff]
        %v452 = vld [vmem:[%s268 + $0x350] sm:$0xff]
        %v453 = vld [vmem:[%s268 + $0x358] sm:$0xff]
        %v454 = vld [vmem:[%s268 + $0x360] sm:$0xff]
        %v455 = vld [vmem:[%s268 + $0x368] sm:$0xff]
        %v456 = vld [vmem:[%s268 + $0x370] sm:$0xff]
        %v457 = vld [vmem:[%s268 + $0x378] sm:$0xff]
        %v458 = vld [vmem:[%s268 + $0x380] sm:$0xff]
        %v459 = vld [vmem:[%s268 + $0x388] sm:$0xff]
        %v460 = vld [vmem:[%s268 + $0x390] sm:$0xff]
        %v461 = vld [vmem:[%s268 + $0x398] sm:$0xff]
        %v462 = vld [vmem:[%s268 + $0x3a0] sm:$0xff]
        %v463 = vld [vmem:[%s268 + $0x3a8] sm:$0xff]
        %v464 = vld [vmem:[%s268 + $0x3b0] sm:$0xff]
        %v465 = vld [vmem:[%s268 + $0x3b8] sm:$0xff]
        %v466 = vld [vmem:[%s268 + $0x3c0] sm:$0xff]
        %v467 = vld [vmem:[%s268 + $0x3c8] sm:$0xff]
        %v468 = vld [vmem:[%s268 + $0x3d0] sm:$0xff]
        %v469 = vld [vmem:[%s268 + $0x3d8] sm:$0xff]
        %v470 = vld [vmem:[%s268 + $0x3e0] sm:$0xff]
        %v471 = vld [vmem:[%s268 + $0x3e8] sm:$0xff]
        %v472 = vld [vmem:[%s268 + $0x3f0] sm:$0xff]
        %v473 = vld [vmem:[%s268 + $0x3f8] sm:$0xff]
        %v474 = vld [vmem:[%s268 + $0x400] sm:$0xff]
        %v475 = vld [vmem:[%s268 + $0x408] sm:$0xff]
        %v476 = vld [vmem:[%s268 + $0x410] sm:$0xff]
        %v477 = vld [vmem:[%s268 + $0x418] sm:$0xff]
        %v478 = vld [vmem:[%s268 + $0x420] sm:$0xff]
        %v479 = vld [vmem:[%s268 + $0x428] sm:$0xff]
        %v480 = vld [vmem:[%s268 + $0x430] sm:$0xff]
        %v481 = vld [vmem:[%s268 + $0x438] sm:$0xff]
        %v482 = vld [vmem:[%s268 + $0x440] sm:$0xff]
        %v483 = vld [vmem:[%s268 + $0x448] sm:$0xff]
        %v484 = vld [vmem:[%s268 + $0x450] sm:$0xff]
        %v485 = vld [vmem:[%s268 + $0x458] sm:$0xff]
        %v486 = vld [vmem:[%s268 + $0x460] sm:$0xff]
        %v487 = vld [vmem:[%s268 + $0x468] sm:$0xff]
        %v488 = vld [vmem:[%s268 + $0x470] sm:$0xff]
        %v489 = vld [vmem:[%s268 + $0x478] sm:$0xff]
        %v490 = vld [vmem:[%s268 + $0x480] sm:$0xff]
        %v491 = vld [vmem:[%s268 + $0x488] sm:$0xff]
        %v492 = vld [vmem:[%s268 + $0x490] sm:$0xff]
        %v493 = vld [vmem:[%s268 + $0x498] sm:$0xff]
        %v494 = vld [vmem:[%s268 + $0x4a0] sm:$0xff]
        %v495 = vld [vmem:[%s268 + $0x4a8] sm:$0xff]
        %v496 = vld [vmem:[%s268 + $0x4b0] sm:$0xff]
        %v497 = vld [vmem:[%s268 + $0x4b8] sm:$0xff]
        %v498 = vld [vmem:[%s268 + $0x4c0] sm:$0xff]
        %v499 = vld [vmem:[%s268 + $0x4c8] sm:$0xff]
        %v500 = vld [vmem:[%s268 + $0x4d0] sm:$0xff]
        %v501 = vld [vmem:[%s268 + $0x4d8] sm:$0xff]
        %v502 = vld [vmem:[%s268 + $0x4e0] sm:$0xff]
        %v503 = vld [vmem:[%s268 + $0x4e8] sm:$0xff]
        %v504 = vld [vmem:[%s268 + $0x4f0] sm:$0xff]
        %v505 = vld [vmem:[%s268 + $0x4f8] sm:$0xff]
        %v506 = vld [vmem:[%s268 + $0x500] sm:$0xff]
        %v507 = vld [vmem:[%s268 + $0x508] sm:$0xff]
        %v508 = vld [vmem:[%s268 + $0x510] sm:$0xff]
        %v509 = vld [vmem:[%s268 + $0x518] sm:$0xff]
        %v510 = vld [vmem:[%s268 + $0x520] sm:$0xff]
        %v511 = vld [vmem:[%s268 + $0x528] sm:$0xff]
        %v512 = vld [vmem:[%s268 + $0x530] sm:$0xff]
        %v513 = vld [vmem:[%s268 + $0x538] sm:$0xff]
        %v514 = vld [vmem:[%s268 + $0x540] sm:$0xff]
        %v515 = vld [vmem:[%s268 + $0x548] sm:$0xff]
        %v516 = vld [vmem:[%s268 + $0x550] sm:$0xff]
        %v517 = vld [vmem:[%s268 + $0x558] sm:$0xff]
        %v518 = vld [vmem:[%s268 + $0x560] sm:$0xff]
        %v519 = vld [vmem:[%s268 + $0x568] sm:$0xff]
        %v520 = vld [vmem:[%s268 + $0x570] sm:$0xff]
        %v521 = vld [vmem:[%s268 + $0x578] sm:$0xff]
        %v522 = vld [vmem:[%s268 + $0x580] sm:$0xff]
        %v523 = vld [vmem:[%s268 + $0x588] sm:$0xff]
        %v524 = vld [vmem:[%s268 + $0x590] sm:$0xff]
        %v525 = vld [vmem:[%s268 + $0x598] sm:$0xff]
        %v526 = vld [vmem:[%s268 + $0x5a0] sm:$0xff]
        %v527 = vld [vmem:[%s268 + $0x5a8] sm:$0xff]
        %v528 = vld [vmem:[%s268 + $0x5b0] sm:$0xff]
        %v529 = vld [vmem:[%s268 + $0x5b8] sm:$0xff]
        %v530 = vld [vmem:[%s268 + $0x5c0] sm:$0xff]
        %v531 = vld [vmem:[%s268 + $0x5c8] sm:$0xff]
        %v532 = vld [vmem:[%s268 + $0x5d0] sm:$0xff]
        %v533 = vld [vmem:[%s268 + $0x5d8] sm:$0xff]
        %v534 = vld [vmem:[%s268 + $0x5e0] sm:$0xff]
        %v535 = vld [vmem:[%s268 + $0x5e8] sm:$0xff]
        %v536 = vld [vmem:[%s268 + $0x5f0] sm:$0xff]
        %v537 = vld [vmem:[%s268 + $0x5f8] sm:$0xff]
        %v538 = vld [vmem:[%s268 + $0x600] sm:$0xff]
        %v539 = vld [vmem:[%s268 + $0x608] sm:$0xff]
        %v540 = vld [vmem:[%s268 + $0x610] sm:$0xff]
        %v541 = vld [vmem:[%s268 + $0x618] sm:$0xff]
        %v542 = vld [vmem:[%s268 + $0x620] sm:$0xff]
        %v543 = vld [vmem:[%s268 + $0x628] sm:$0xff]
        %v544 = vld [vmem:[%s268 + $0x630] sm:$0xff]
        %v545 = vld [vmem:[%s268 + $0x638] sm:$0xff]
        %v546 = vld [vmem:[%s268 + $0x640] sm:$0xff]
        %v547 = vld [vmem:[%s268 + $0x648] sm:$0xff]
        %v548 = vld [vmem:[%s268 + $0x650] sm:$0xff]
        %v549 = vld [vmem:[%s268 + $0x658] sm:$0xff]
        %v550 = vld [vmem:[%s268 + $0x660] sm:$0xff]
        %v551 = vld [vmem:[%s268 + $0x668] sm:$0xff]
        %v552 = vld [vmem:[%s268 + $0x670] sm:$0xff]
        %v553 = vld [vmem:[%s268 + $0x678] sm:$0xff]
        %v554 = vld [vmem:[%s268 + $0x680] sm:$0xff]
        %v555 = vld [vmem:[%s268 + $0x688] sm:$0xff]
        %v556 = vld [vmem:[%s268 + $0x690] sm:$0xff]
        %v557 = vld [vmem:[%s268 + $0x698] sm:$0xff]
        %v558 = vld [vmem:[%s268 + $0x6a0] sm:$0xff]
        %v559 = vld [vmem:[%s268 + $0x6a8] sm:$0xff]
        %v560 = vld [vmem:[%s268 + $0x6b0] sm:$0xff]
        %v561 = vld [vmem:[%s268 + $0x6b8] sm:$0xff]
        %v562 = vld [vmem:[%s268 + $0x6c0] sm:$0xff]
        %v563 = vld [vmem:[%s268 + $0x6c8] sm:$0xff]
        %v564 = vld [vmem:[%s268 + $0x6d0] sm:$0xff]
        %v565 = vld [vmem:[%s268 + $0x6d8] sm:$0xff]
        %v566 = vld [vmem:[%s268 + $0x6e0] sm:$0xff]
        %v567 = vld [vmem:[%s268 + $0x6e8] sm:$0xff]
        %v568 = vld [vmem:[%s268 + $0x6f0] sm:$0xff]
        %v569 = vld [vmem:[%s268 + $0x6f8] sm:$0xff]
        %v570 = vld [vmem:[%s268 + $0x700] sm:$0xff]
        %v571 = vld [vmem:[%s268 + $0x708] sm:$0xff]
        %v572 = vld [vmem:[%s268 + $0x710] sm:$0xff]
        %v573 = vld [vmem:[%s268 + $0x718] sm:$0xff]
        %v574 = vld [vmem:[%s268 + $0x720] sm:$0xff]
        %v575 = vld [vmem:[%s268 + $0x728] sm:$0xff]
        %v576 = vld [vmem:[%s268 + $0x730] sm:$0xff]
        %v577 = vld [vmem:[%s268 + $0x738] sm:$0xff]
        %v578 = vld [vmem:[%s268 + $0x740] sm:$0xff]
        %v579 = vld [vmem:[%s268 + $0x748] sm:$0xff]
        %v580 = vld [vmem:[%s268 + $0x750] sm:$0xff]
        %v581 = vld [vmem:[%s268 + $0x758] sm:$0xff]
        %v582 = vld [vmem:[%s268 + $0x760] sm:$0xff]
        %v583 = vld [vmem:[%s268 + $0x768] sm:$0xff]
        %v584 = vld [vmem:[%s268 + $0x770] sm:$0xff]
        %v585 = vld [vmem:[%s268 + $0x778] sm:$0xff]
        %v586 = vld [vmem:[%s268 + $0x780] sm:$0xff]
        %v587 = vld [vmem:[%s268 + $0x788] sm:$0xff]
        %v588 = vld [vmem:[%s268 + $0x790] sm:$0xff]
        %v589 = vld [vmem:[%s268 + $0x798] sm:$0xff]
        %v590 = vld [vmem:[%s268 + $0x7a0] sm:$0xff]
        %v591 = vld [vmem:[%s268 + $0x7a8] sm:$0xff]
        %v592 = vld [vmem:[%s268 + $0x7b0] sm:$0xff]
        %v593 = vld [vmem:[%s268 + $0x7b8] sm:$0xff]
        %v594 = vld [vmem:[%s268 + $0x7c0] sm:$0xff]
        %v595 = vld [vmem:[%s268 + $0x7c8] sm:$0xff]
        %v596 = vld [vmem:[%s268 + $0x7d0] sm:$0xff]
        %v597 = vld [vmem:[%s268 + $0x7d8] sm:$0xff]
        %v598 = vld [vmem:[%s268 + $0x7e0] sm:$0xff]
        %v599 = vld [vmem:[%s268 + $0x7e8] sm:$0xff]
        %v600 = vld [vmem:[%s268 + $0x7f0] sm:$0xff]
        %v601 = vld [vmem:[%s268 + $0x7f8] sm:$0xff]
        %v602 = vld [vmem:[%s268 + $0x800] sm:$0xff]
        %v603 = vld [vmem:[%s268 + $0x808] sm:$0xff]
        %v604 = vld [vmem:[%s268 + $0x810] sm:$0xff]
        %v605 = vld [vmem:[%s268 + $0x818] sm:$0xff]
        %v606 = vld [vmem:[%s268 + $0x820] sm:$0xff]
        %v607 = vld [vmem:[%s268 + $0x828] sm:$0xff]
        %v608 = vld [vmem:[%s268 + $0x830] sm:$0xff]
        %v609 = vld [vmem:[%s268 + $0x838] sm:$0xff]
        %v610 = vld [vmem:[%s268 + $0x840] sm:$0xff]
        %v611 = vld [vmem:[%s268 + $0x848] sm:$0xff]
        %v612 = vld [vmem:[%s268 + $0x850] sm:$0xff]
        %v613 = vld [vmem:[%s268 + $0x858] sm:$0xff]
        %v614 = vld [vmem:[%s268 + $0x860] sm:$0xff]
        %v615 = vld [vmem:[%s268 + $0x868] sm:$0xff]
        %v616 = vld [vmem:[%s268 + $0x870] sm:$0xff]
        %v617 = vld [vmem:[%s268 + $0x878] sm:$0xff]
        %v618 = vld [vmem:[%s268 + $0x880] sm:$0xff]
        %v619 = vld [vmem:[%s268 + $0x888] sm:$0xff]
        %v620 = vld [vmem:[%s268 + $0x890] sm:$0xff]
        %v621 = vld [vmem:[%s268 + $0x898] sm:$0xff]
        %v622 = vld [vmem:[%s268 + $0x8a0] sm:$0xff]
        %v623 = vld [vmem:[%s268 + $0x8a8] sm:$0xff]
        %v624 = vld [vmem:[%s268 + $0x8b0] sm:$0xff]
        %v625 = vld [vmem:[%s268 + $0x8b8] sm:$0xff]
        %v626 = vld [vmem:[%s268 + $0x8c0] sm:$0xff]
        %v627 = vld [vmem:[%s268 + $0x8c8] sm:$0xff]
        %v628 = vld [vmem:[%s268 + $0x8d0] sm:$0xff]
        %v629 = vld [vmem:[%s268 + $0x8d8] sm:$0xff]
        %v630 = vld [vmem:[%s268 + $0x8e0] sm:$0xff]
        %v631 = vld [vmem:[%s268 + $0x8e8] sm:$0xff]
        %v632 = vld [vmem:[%s268 + $0x8f0] sm:$0xff]
        %v633 = vld [vmem:[%s268 + $0x8f8] sm:$0xff]
        %v634 = vld [vmem:[%s268 + $0x900] sm:$0xff]
        %v635 = vld [vmem:[%s268 + $0x908] sm:$0xff]
        %v636 = vld [vmem:[%s268 + $0x910] sm:$0xff]
        %v637 = vld [vmem:[%s268 + $0x918] sm:$0xff]
        %v638 = vld [vmem:[%s268 + $0x920] sm:$0xff]
        %v639 = vld [vmem:[%s268 + $0x928] sm:$0xff]
        %v640 = vld [vmem:[%s268 + $0x930] sm:$0xff]
        %v641 = vld [vmem:[%s268 + $0x938] sm:$0xff]
        %v642 = vld [vmem:[%s268 + $0x940] sm:$0xff]
        %v643 = vld [vmem:[%s268 + $0x948] sm:$0xff]
        %v644 = vld [vmem:[%s268 + $0x950] sm:$0xff]
        %v645 = vld [vmem:[%s268 + $0x958] sm:$0xff]
        %v646 = vld [vmem:[%s268 + $0x960] sm:$0xff]
        %v647 = vld [vmem:[%s268 + $0x968] sm:$0xff]
        %v648 = vld [vmem:[%s268 + $0x970] sm:$0xff]
        %v649 = vld [vmem:[%s268 + $0x978] sm:$0xff]
        %v650 = vld [vmem:[%s268 + $0x980] sm:$0xff]
        %v651 = vld [vmem:[%s268 + $0x988] sm:$0xff]
        %v652 = vld [vmem:[%s268 + $0x990] sm:$0xff]
        %v653 = vld [vmem:[%s268 + $0x998] sm:$0xff]
        %v654 = vld [vmem:[%s268 + $0x9a0] sm:$0xff]
        %v655 = vld [vmem:[%s268 + $0x9a8] sm:$0xff]
        %v656 = vld [vmem:[%s268 + $0x9b0] sm:$0xff]
        %v657 = vld [vmem:[%s268 + $0x9b8] sm:$0xff]
        %v658 = vld [vmem:[%s268 + $0x9c0] sm:$0xff]
        %v659 = vld [vmem:[%s268 + $0x9c8] sm:$0xff]
        %v660 = vld [vmem:[%s268 + $0x9d0] sm:$0xff]
        %v661 = vld [vmem:[%s268 + $0x9d8] sm:$0xff]
        %v662 = vld [vmem:[%s268 + $0x9e0] sm:$0xff]
        %v663 = vld [vmem:[%s268 + $0x9e8] sm:$0xff]
        %v664 = vld [vmem:[%s268 + $0x9f0] sm:$0xff]
        %v665 = vld [vmem:[%s268 + $0x9f8] sm:$0xff]
        %v666 = vld [vmem:[%s268 + $0xa00] sm:$0xff]
        %v667 = vld [vmem:[%s268 + $0xa08] sm:$0xff]
        %v668 = vld [vmem:[%s268 + $0xa10] sm:$0xff]
        %v669 = vld [vmem:[%s268 + $0xa18] sm:$0xff]
        %v670 = vld [vmem:[%s268 + $0xa20] sm:$0xff]
        %v671 = vld [vmem:[%s268 + $0xa28] sm:$0xff]
        %v672 = vld [vmem:[%s268 + $0xa30] sm:$0xff]
        %v673 = vld [vmem:[%s268 + $0xa38] sm:$0xff]
        %v674 = vld [vmem:[%s268 + $0xa40] sm:$0xff]
        %v675 = vld [vmem:[%s268 + $0xa48] sm:$0xff]
        %v676 = vld [vmem:[%s268 + $0xa50] sm:$0xff]
        %v677 = vld [vmem:[%s268 + $0xa58] sm:$0xff]
        %v678 = vld [vmem:[%s268 + $0xa60] sm:$0xff]
        %v679 = vld [vmem:[%s268 + $0xa68] sm:$0xff]
        %v680 = vld [vmem:[%s268 + $0xa70] sm:$0xff]
        %v681 = vld [vmem:[%s268 + $0xa78] sm:$0xff]
        %v682 = vld [vmem:[%s268 + $0xa80] sm:$0xff]
        %v683 = vld [vmem:[%s268 + $0xa88] sm:$0xff]
        %v684 = vld [vmem:[%s268 + $0xa90] sm:$0xff]
        %v685 = vld [vmem:[%s268 + $0xa98] sm:$0xff]
        %v686 = vld [vmem:[%s268 + $0xaa0] sm:$0xff]
        %v687 = vld [vmem:[%s268 + $0xaa8] sm:$0xff]
        %v688 = vld [vmem:[%s268 + $0xab0] sm:$0xff]
        %v689 = vld [vmem:[%s268 + $0xab8] sm:$0xff]
        %v690 = vld [vmem:[%s268 + $0xac0] sm:$0xff]
        %v691 = vld [vmem:[%s268 + $0xac8] sm:$0xff]
        %v692 = vld [vmem:[%s268 + $0xad0] sm:$0xff]
        %v693 = vld [vmem:[%s268 + $0xad8] sm:$0xff]
        %v694 = vld [vmem:[%s268 + $0xae0] sm:$0xff]
        %v695 = vld [vmem:[%s268 + $0xae8] sm:$0xff]
        %v696 = vld [vmem:[%s268 + $0xaf0] sm:$0xff]
        %v697 = vld [vmem:[%s268 + $0xaf8] sm:$0xff]
        %v698 = vld [vmem:[%s268 + $0xb00] sm:$0xff]
        %v699 = vld [vmem:[%s268 + $0xb08] sm:$0xff]
        %v700 = vld [vmem:[%s268 + $0xb10] sm:$0xff]
        %v701 = vld [vmem:[%s268 + $0xb18] sm:$0xff]
        %v702 = vld [vmem:[%s268 + $0xb20] sm:$0xff]
        %v703 = vld [vmem:[%s268 + $0xb28] sm:$0xff]
        %v704 = vld [vmem:[%s268 + $0xb30] sm:$0xff]
        %v705 = vld [vmem:[%s268 + $0xb38] sm:$0xff]
        %v706 = vld [vmem:[%s268 + $0xb40] sm:$0xff]
        %v707 = vld [vmem:[%s268 + $0xb48] sm:$0xff]
        %v708 = vld [vmem:[%s268 + $0xb50] sm:$0xff]
        %v709 = vld [vmem:[%s268 + $0xb58] sm:$0xff]
        %v710 = vld [vmem:[%s268 + $0xb60] sm:$0xff]
        %v711 = vld [vmem:[%s268 + $0xb68] sm:$0xff]
        %v712 = vld [vmem:[%s268 + $0xb70] sm:$0xff]
        %v713 = vld [vmem:[%s268 + $0xb78] sm:$0xff]
        %v714 = vld [vmem:[%s268 + $0xb80] sm:$0xff]
        %v715 = vld [vmem:[%s268 + $0xb88] sm:$0xff]
        %v716 = vld [vmem:[%s268 + $0xb90] sm:$0xff]
        %v717 = vld [vmem:[%s268 + $0xb98] sm:$0xff]
        %v718 = vld [vmem:[%s268 + $0xba0] sm:$0xff]
        %v719 = vld [vmem:[%s268 + $0xba8] sm:$0xff]
        %v720 = vld [vmem:[%s268 + $0xbb0] sm:$0xff]
        %v721 = vld [vmem:[%s268 + $0xbb8] sm:$0xff]
        %v722 = vld [vmem:[%s268 + $0xbc0] sm:$0xff]
        %v723 = vld [vmem:[%s268 + $0xbc8] sm:$0xff]
        %v724 = vld [vmem:[%s268 + $0xbd0] sm:$0xff]
        %v725 = vld [vmem:[%s268 + $0xbd8] sm:$0xff]
        %v726 = vld [vmem:[%s268 + $0xbe0] sm:$0xff]
        %v727 = vld [vmem:[%s268 + $0xbe8] sm:$0xff]
        %v728 = vld [vmem:[%s268 + $0xbf0] sm:$0xff]
        %v729 = vld [vmem:[%s268 + $0xbf8] sm:$0xff]
        %v730 = vld [vmem:[%s268 + $0xc00] sm:$0xff]
        %v731 = vld [vmem:[%s268 + $0xc08] sm:$0xff]
        %v732 = vld [vmem:[%s268 + $0xc10] sm:$0xff]
        %v733 = vld [vmem:[%s268 + $0xc18] sm:$0xff]
        %v734 = vld [vmem:[%s268 + $0xc20] sm:$0xff]
        %v735 = vld [vmem:[%s268 + $0xc28] sm:$0xff]
        %v736 = vld [vmem:[%s268 + $0xc30] sm:$0xff]
        %v737 = vld [vmem:[%s268 + $0xc38] sm:$0xff]
        %v738 = vld [vmem:[%s278] sm:$0xf]
        %v740 = vperm.slane %v738, 0
        %v741 = vperm.slane %v738, 1
        %v742 = vperm.slane %v738, 2
        %v743 = vperm.slane %v738, 3
        %vm748 = vcmask 130048
        %v750 = vsel %vm748, %v345, 0
        %752 = vmatpush.msra.mxu0 %v406
        %753 = vmatpush.msra.mxu0 %v402
        %754 = vmatpush.msra.mxu0 %v398
        %755 = vmatpush.msra.mxu0 %v394
        %756 = vmatpush.msra.mxu0 %v390
        %757 = vmatpush.msra.mxu0 %v386
        %758 = vmatpush.msra.mxu0 %v382
        %759 = vmatpush.msra.mxu0 %v378
        %760 = vmatpush.msra.mxu0 %v374
        %761 = vmatpush.msra.mxu0 %v370
        %762 = vmatpush.msra.mxu0 %v366
        %763 = vmatpush.msra.mxu0 %v362
        %764 = vmatpush.msra.mxu0 %v358
        %765 = vmatpush.msra.mxu0 %v354
        %766 = vmatpush.msra.mxu0 %v350
        %767 = vmatpush.msra.mxu0 %v346
        %768 = vmatmul.f32.gmra.mxu0 %v339
        %v769 = vpop.f32.mrf.mxu0
        %v770 = vadd.f32 %v740, %v769
        %771 = vdwg.mxu0
        %772 = vmatpush.msra.mxu0 %v470
        %773 = vmatpush.msra.mxu0 %v466
        %774 = vmatpush.msra.mxu0 %v462
        %775 = vmatpush.msra.mxu0 %v458
        %776 = vmatpush.msra.mxu0 %v454
        %777 = vmatpush.msra.mxu0 %v450
        %778 = vmatpush.msra.mxu0 %v446
        %779 = vmatpush.msra.mxu0 %v442
        %780 = vmatpush.msra.mxu0 %v438
        %781 = vmatpush.msra.mxu0 %v434
        %782 = vmatpush.msra.mxu0 %v430
        %783 = vmatpush.msra.mxu0 %v426
        %784 = vmatpush.msra.mxu0 %v422
        %785 = vmatpush.msra.mxu0 %v418
        %786 = vmatpush.msra.mxu0 %v414
        %787 = vmatpush.msra.mxu0 %v410
        %788 = vmatmul.f32.gmra.mxu0 %v340
        %v789 = vpop.f32.mrf.mxu0
        %v790 = vadd.f32 %v770, %v789
        %791 = vdwg.mxu0
        %792 = vmatpush.msra.mxu0 %v534
        %793 = vmatpush.msra.mxu0 %v530
        %794 = vmatpush.msra.mxu0 %v526
        %795 = vmatpush.msra.mxu0 %v522
        %796 = vmatpush.msra.mxu0 %v518
        %797 = vmatpush.msra.mxu0 %v514
        %798 = vmatpush.msra.mxu0 %v510
        %799 = vmatpush.msra.mxu0 %v506
        %800 = vmatpush.msra.mxu0 %v502
        %801 = vmatpush.msra.mxu0 %v498
        %802 = vmatpush.msra.mxu0 %v494
        %803 = vmatpush.msra.mxu0 %v490
        %804 = vmatpush.msra.mxu0 %v486
        %805 = vmatpush.msra.mxu0 %v482
        %806 = vmatpush.msra.mxu0 %v478
        %807 = vmatpush.msra.mxu0 %v474
        %808 = vmatmul.f32.gmra.mxu0 %v341
        %v809 = vpop.f32.mrf.mxu0
        %v810 = vadd.f32 %v790, %v809
        %811 = vdwg.mxu0
        %812 = vmatpush.msra.mxu0 %v598
        %813 = vmatpush.msra.mxu0 %v594
        %814 = vmatpush.msra.mxu0 %v590
        %815 = vmatpush.msra.mxu0 %v586
        %816 = vmatpush.msra.mxu0 %v582
        %817 = vmatpush.msra.mxu0 %v578
        %818 = vmatpush.msra.mxu0 %v574
        %819 = vmatpush.msra.mxu0 %v570
        %820 = vmatpush.msra.mxu0 %v566
        %821 = vmatpush.msra.mxu0 %v562
        %822 = vmatpush.msra.mxu0 %v558
        %823 = vmatpush.msra.mxu0 %v554
        %824 = vmatpush.msra.mxu0 %v550
        %825 = vmatpush.msra.mxu0 %v546
        %826 = vmatpush.msra.mxu0 %v542
        %827 = vmatpush.msra.mxu0 %v538
        %828 = vmatmul.f32.gmra.mxu0 %v342
        %v829 = vpop.f32.mrf.mxu0
        %v830 = vadd.f32 %v810, %v829
        %831 = vdwg.mxu0
        %832 = vmatpush.msra.mxu0 %v662
        %833 = vmatpush.msra.mxu0 %v658
        %834 = vmatpush.msra.mxu0 %v654
        %835 = vmatpush.msra.mxu0 %v650
        %836 = vmatpush.msra.mxu0 %v646
        %837 = vmatpush.msra.mxu0 %v642
        %838 = vmatpush.msra.mxu0 %v638
        %839 = vmatpush.msra.mxu0 %v634
        %840 = vmatpush.msra.mxu0 %v630
        %841 = vmatpush.msra.mxu0 %v626
        %842 = vmatpush.msra.mxu0 %v622
        %843 = vmatpush.msra.mxu0 %v618
        %844 = vmatpush.msra.mxu0 %v614
        %845 = vmatpush.msra.mxu0 %v610
        %846 = vmatpush.msra.mxu0 %v606
        %847 = vmatpush.msra.mxu0 %v602
        %848 = vmatmul.f32.gmra.mxu0 %v343
        %v849 = vpop.f32.mrf.mxu0
        %v850 = vadd.f32 %v830, %v849
        %851 = vdwg.mxu0
        %852 = vmatpush.msra.mxu0 %v726
        %853 = vmatpush.msra.mxu0 %v722
        %854 = vmatpush.msra.mxu0 %v718
        %855 = vmatpush.msra.mxu0 %v714
        %856 = vmatpush.msra.mxu0 %v710
        %857 = vmatpush.msra.mxu0 %v706
        %858 = vmatpush.msra.mxu0 %v702
        %859 = vmatpush.msra.mxu0 %v698
        %860 = vmatpush.msra.mxu0 %v694
        %861 = vmatpush.msra.mxu0 %v690
        %862 = vmatpush.msra.mxu0 %v686
        %863 = vmatpush.msra.mxu0 %v682
        %864 = vmatpush.msra.mxu0 %v678
        %865 = vmatpush.msra.mxu0 %v674
        %866 = vmatpush.msra.mxu0 %v670
        %867 = vmatpush.msra.mxu0 %v666
        %868 = vmatmul.f32.gmra.mxu0 %v344
        %v869 = vpop.f32.mrf.mxu0
        %v870 = vadd.f32 %v850, %v869
        %871 = vdwg.mxu0
        %872 = vmatpush.msra.mxu0 0.0
        %873 = vmatpush.msra.mxu0 0.0
        %874 = vmatpush.msra.mxu0 0.0
        %875 = vmatpush.msra.mxu0 0.0
        %876 = vmatpush.msra.mxu0 0.0
        %877 = vmatpush.msra.mxu0 0.0
        %878 = vmatpush.msra.mxu0 0.0
        %879 = vmatpush.msra.mxu0 0.0
        %880 = vmatpush.msra.mxu0 0.0
        %881 = vmatpush.msra.mxu0 0.0
        %882 = vmatpush.msra.mxu0 0.0
        %883 = vmatpush.msra.mxu0 0.0
        %884 = vmatpush.msra.mxu0 0.0
        %885 = vmatpush.msra.mxu0 0.0
        %886 = vmatpush.msra.mxu0 %v734
        %887 = vmatpush.msra.mxu0 %v730
        %888 = vmatmul.f32.gmra.mxu0 %v750
        %v889 = vpop.f32.mrf.mxu0
        %v890 = vadd.f32 %v870, %v889
        %891 = vdwg.mxu0
        %892 = vmatpush.msra.mxu0 %v407
        %893 = vmatpush.msra.mxu0 %v403
        %894 = vmatpush.msra.mxu0 %v399
        %895 = vmatpush.msra.mxu0 %v395
        %896 = vmatpush.msra.mxu0 %v391
        %897 = vmatpush.msra.mxu0 %v387
        %898 = vmatpush.msra.mxu0 %v383
        %899 = vmatpush.msra.mxu0 %v379
        %900 = vmatpush.msra.mxu0 %v375
        %901 = vmatpush.msra.mxu0 %v371
        %902 = vmatpush.msra.mxu0 %v367
        %903 = vmatpush.msra.mxu0 %v363
        %904 = vmatpush.msra.mxu0 %v359
        %905 = vmatpush.msra.mxu0 %v355
        %906 = vmatpush.msra.mxu0 %v351
        %907 = vmatpush.msra.mxu0 %v347
        %908 = vmatmul.f32.gmra.mxu0 %v339
        %v909 = vpop.f32.mrf.mxu0
        %v910 = vadd.f32 %v741, %v909
        %911 = vdwg.mxu0
        %912 = vmatpush.msra.mxu0 %v471
        %913 = vmatpush.msra.mxu0 %v467
        %914 = vmatpush.msra.mxu0 %v463
        %915 = vmatpush.msra.mxu0 %v459
        %916 = vmatpush.msra.mxu0 %v455
        %917 = vmatpush.msra.mxu0 %v451
        %918 = vmatpush.msra.mxu0 %v447
        %919 = vmatpush.msra.mxu0 %v443
        %920 = vmatpush.msra.mxu0 %v439
        %921 = vmatpush.msra.mxu0 %v435
        %922 = vmatpush.msra.mxu0 %v431
        %923 = vmatpush.msra.mxu0 %v427
        %924 = vmatpush.msra.mxu0 %v423
        %925 = vmatpush.msra.mxu0 %v419
        %926 = vmatpush.msra.mxu0 %v415
        %927 = vmatpush.msra.mxu0 %v411
        %928 = vmatmul.f32.gmra.mxu0 %v340
        %v929 = vpop.f32.mrf.mxu0
        %v930 = vadd.f32 %v910, %v929
        %931 = vdwg.mxu0
        %932 = vmatpush.msra.mxu0 %v535
        %933 = vmatpush.msra.mxu0 %v531
        %934 = vmatpush.msra.mxu0 %v527
        %935 = vmatpush.msra.mxu0 %v523
        %936 = vmatpush.msra.mxu0 %v519
        %937 = vmatpush.msra.mxu0 %v515
        %938 = vmatpush.msra.mxu0 %v511
        %939 = vmatpush.msra.mxu0 %v507
        %940 = vmatpush.msra.mxu0 %v503
        %941 = vmatpush.msra.mxu0 %v499
        %942 = vmatpush.msra.mxu0 %v495
        %943 = vmatpush.msra.mxu0 %v491
        %944 = vmatpush.msra.mxu0 %v487
        %945 = vmatpush.msra.mxu0 %v483
        %946 = vmatpush.msra.mxu0 %v479
        %947 = vmatpush.msra.mxu0 %v475
        %948 = vmatmul.f32.gmra.mxu0 %v341
        %v949 = vpop.f32.mrf.mxu0
        %v950 = vadd.f32 %v930, %v949
        %951 = vdwg.mxu0
        %952 = vmatpush.msra.mxu0 %v599
        %953 = vmatpush.msra.mxu0 %v595
        %954 = vmatpush.msra.mxu0 %v591
        %955 = vmatpush.msra.mxu0 %v587
        %956 = vmatpush.msra.mxu0 %v583
        %957 = vmatpush.msra.mxu0 %v579
        %958 = vmatpush.msra.mxu0 %v575
        %959 = vmatpush.msra.mxu0 %v571
        %960 = vmatpush.msra.mxu0 %v567
        %961 = vmatpush.msra.mxu0 %v563
        %962 = vmatpush.msra.mxu0 %v559
        %963 = vmatpush.msra.mxu0 %v555
        %964 = vmatpush.msra.mxu0 %v551
        %965 = vmatpush.msra.mxu0 %v547
        %966 = vmatpush.msra.mxu0 %v543
        %967 = vmatpush.msra.mxu0 %v539
        %968 = vmatmul.f32.gmra.mxu0 %v342
        %v969 = vpop.f32.mrf.mxu0
        %v970 = vadd.f32 %v950, %v969
        %971 = vdwg.mxu0
        %972 = vmatpush.msra.mxu0 %v663
        %973 = vmatpush.msra.mxu0 %v659
        %974 = vmatpush.msra.mxu0 %v655
        %975 = vmatpush.msra.mxu0 %v651
        %976 = vmatpush.msra.mxu0 %v647
        %977 = vmatpush.msra.mxu0 %v643
        %978 = vmatpush.msra.mxu0 %v639
        %979 = vmatpush.msra.mxu0 %v635
        %980 = vmatpush.msra.mxu0 %v631
        %981 = vmatpush.msra.mxu0 %v627
        %982 = vmatpush.msra.mxu0 %v623
        %983 = vmatpush.msra.mxu0 %v619
        %984 = vmatpush.msra.mxu0 %v615
        %985 = vmatpush.msra.mxu0 %v611
        %986 = vmatpush.msra.mxu0 %v607
        %987 = vmatpush.msra.mxu0 %v603
        %988 = vmatmul.f32.gmra.mxu0 %v343
        %v989 = vpop.f32.mrf.mxu0
        %v990 = vadd.f32 %v970, %v989
        %991 = vdwg.mxu0
        %992 = vmatpush.msra.mxu0 %v727
        %993 = vmatpush.msra.mxu0 %v723
        %994 = vmatpush.msra.mxu0 %v719
        %995 = vmatpush.msra.mxu0 %v715
        %996 = vmatpush.msra.mxu0 %v711
        %997 = vmatpush.msra.mxu0 %v707
        %998 = vmatpush.msra.mxu0 %v703
        %999 = vmatpush.msra.mxu0 %v699
        %1000 = vmatpush.msra.mxu0 %v695
        %1001 = vmatpush.msra.mxu0 %v691
        %1002 = vmatpush.msra.mxu0 %v687
        %1003 = vmatpush.msra.mxu0 %v683
        %1004 = vmatpush.msra.mxu0 %v679
        %1005 = vmatpush.msra.mxu0 %v675
        %1006 = vmatpush.msra.mxu0 %v671
        %1007 = vmatpush.msra.mxu0 %v667
        %1008 = vmatmul.f32.gmra.mxu0 %v344
        %v1009 = vpop.f32.mrf.mxu0
        %v1010 = vadd.f32 %v990, %v1009
        %1011 = vdwg.mxu0
        %1012 = vmatpush.msra.mxu0 0.0
        %1013 = vmatpush.msra.mxu0 0.0
        %1014 = vmatpush.msra.mxu0 0.0
        %1015 = vmatpush.msra.mxu0 0.0
        %1016 = vmatpush.msra.mxu0 0.0
        %1017 = vmatpush.msra.mxu0 0.0
        %1018 = vmatpush.msra.mxu0 0.0
        %1019 = vmatpush.msra.mxu0 0.0
        %1020 = vmatpush.msra.mxu0 0.0
        %1021 = vmatpush.msra.mxu0 0.0
        %1022 = vmatpush.msra.mxu0 0.0
        %1023 = vmatpush.msra.mxu0 0.0
        %1024 = vmatpush.msra.mxu0 0.0
        %1025 = vmatpush.msra.mxu0 0.0
        %1026 = vmatpush.msra.mxu0 %v735
        %1027 = vmatpush.msra.mxu0 %v731
        %1028 = vmatmul.f32.gmra.mxu0 %v750
        %v1029 = vpop.f32.mrf.mxu0
        %v1030 = vadd.f32 %v1010, %v1029
        %1031 = vdwg.mxu0
        %1032 = vmatpush.msra.mxu0 %v408
        %1033 = vmatpush.msra.mxu0 %v404
        %1034 = vmatpush.msra.mxu0 %v400
        %1035 = vmatpush.msra.mxu0 %v396
        %1036 = vmatpush.msra.mxu0 %v392
        %1037 = vmatpush.msra.mxu0 %v388
        %1038 = vmatpush.msra.mxu0 %v384
        %1039 = vmatpush.msra.mxu0 %v380
        %1040 = vmatpush.msra.mxu0 %v376
        %1041 = vmatpush.msra.mxu0 %v372
        %1042 = vmatpush.msra.mxu0 %v368
        %1043 = vmatpush.msra.mxu0 %v364
        %1044 = vmatpush.msra.mxu0 %v360
        %1045 = vmatpush.msra.mxu0 %v356
        %1046 = vmatpush.msra.mxu0 %v352
        %1047 = vmatpush.msra.mxu0 %v348
        %1048 = vmatmul.f32.gmra.mxu0 %v339
        %v1049 = vpop.f32.mrf.mxu0
        %v1050 = vadd.f32 %v742, %v1049
        %1051 = vdwg.mxu0
        %1052 = vmatpush.msra.mxu0 %v472
        %1053 = vmatpush.msra.mxu0 %v468
        %1054 = vmatpush.msra.mxu0 %v464
        %1055 = vmatpush.msra.mxu0 %v460
        %1056 = vmatpush.msra.mxu0 %v456
        %1057 = vmatpush.msra.mxu0 %v452
        %1058 = vmatpush.msra.mxu0 %v448
        %1059 = vmatpush.msra.mxu0 %v444
        %1060 = vmatpush.msra.mxu0 %v440
        %1061 = vmatpush.msra.mxu0 %v436
        %1062 = vmatpush.msra.mxu0 %v432
        %1063 = vmatpush.msra.mxu0 %v428
        %1064 = vmatpush.msra.mxu0 %v424
        %1065 = vmatpush.msra.mxu0 %v420
        %1066 = vmatpush.msra.mxu0 %v416
        %1067 = vmatpush.msra.mxu0 %v412
        %1068 = vmatmul.f32.gmra.mxu0 %v340
        %v1069 = vpop.f32.mrf.mxu0
        %v1070 = vadd.f32 %v1050, %v1069
        %1071 = vdwg.mxu0
        %1072 = vmatpush.msra.mxu0 %v536
        %1073 = vmatpush.msra.mxu0 %v532
        %1074 = vmatpush.msra.mxu0 %v528
        %1075 = vmatpush.msra.mxu0 %v524
        %1076 = vmatpush.msra.mxu0 %v520
        %1077 = vmatpush.msra.mxu0 %v516
        %1078 = vmatpush.msra.mxu0 %v512
        %1079 = vmatpush.msra.mxu0 %v508
        %1080 = vmatpush.msra.mxu0 %v504
        %1081 = vmatpush.msra.mxu0 %v500
        %1082 = vmatpush.msra.mxu0 %v496
        %1083 = vmatpush.msra.mxu0 %v492
        %1084 = vmatpush.msra.mxu0 %v488
        %1085 = vmatpush.msra.mxu0 %v484
        %1086 = vmatpush.msra.mxu0 %v480
        %1087 = vmatpush.msra.mxu0 %v476
        %1088 = vmatmul.f32.gmra.mxu0 %v341
        %v1089 = vpop.f32.mrf.mxu0
        %v1090 = vadd.f32 %v1070, %v1089
        %1091 = vdwg.mxu0
        %1092 = vmatpush.msra.mxu0 %v600
        %1093 = vmatpush.msra.mxu0 %v596
        %1094 = vmatpush.msra.mxu0 %v592
        %1095 = vmatpush.msra.mxu0 %v588
        %1096 = vmatpush.msra.mxu0 %v584
        %1097 = vmatpush.msra.mxu0 %v580
        %1098 = vmatpush.msra.mxu0 %v576
        %1099 = vmatpush.msra.mxu0 %v572
        %1100 = vmatpush.msra.mxu0 %v568
        %1101 = vmatpush.msra.mxu0 %v564
        %1102 = vmatpush.msra.mxu0 %v560
        %1103 = vmatpush.msra.mxu0 %v556
        %1104 = vmatpush.msra.mxu0 %v552
        %1105 = vmatpush.msra.mxu0 %v548
        %1106 = vmatpush.msra.mxu0 %v544
        %1107 = vmatpush.msra.mxu0 %v540
        %1108 = vmatmul.f32.gmra.mxu0 %v342
        %v1109 = vpop.f32.mrf.mxu0
        %v1110 = vadd.f32 %v1090, %v1109
        %1111 = vdwg.mxu0
        %1112 = vmatpush.msra.mxu0 %v664
        %1113 = vmatpush.msra.mxu0 %v660
        %1114 = vmatpush.msra.mxu0 %v656
        %1115 = vmatpush.msra.mxu0 %v652
        %1116 = vmatpush.msra.mxu0 %v648
        %1117 = vmatpush.msra.mxu0 %v644
        %1118 = vmatpush.msra.mxu0 %v640
        %1119 = vmatpush.msra.mxu0 %v636
        %1120 = vmatpush.msra.mxu0 %v632
        %1121 = vmatpush.msra.mxu0 %v628
        %1122 = vmatpush.msra.mxu0 %v624
        %1123 = vmatpush.msra.mxu0 %v620
        %1124 = vmatpush.msra.mxu0 %v616
        %1125 = vmatpush.msra.mxu0 %v612
        %1126 = vmatpush.msra.mxu0 %v608
        %1127 = vmatpush.msra.mxu0 %v604
        %1128 = vmatmul.f32.gmra.mxu0 %v343
        %v1129 = vpop.f32.mrf.mxu0
        %v1130 = vadd.f32 %v1110, %v1129
        %1131 = vdwg.mxu0
        %1132 = vmatpush.msra.mxu0 %v728
        %1133 = vmatpush.msra.mxu0 %v724
        %1134 = vmatpush.msra.mxu0 %v720
        %1135 = vmatpush.msra.mxu0 %v716
        %1136 = vmatpush.msra.mxu0 %v712
        %1137 = vmatpush.msra.mxu0 %v708
        %1138 = vmatpush.msra.mxu0 %v704
        %1139 = vmatpush.msra.mxu0 %v700
        %1140 = vmatpush.msra.mxu0 %v696
        %1141 = vmatpush.msra.mxu0 %v692
        %1142 = vmatpush.msra.mxu0 %v688
        %1143 = vmatpush.msra.mxu0 %v684
        %1144 = vmatpush.msra.mxu0 %v680
        %1145 = vmatpush.msra.mxu0 %v676
        %1146 = vmatpush.msra.mxu0 %v672
        %1147 = vmatpush.msra.mxu0 %v668
        %1148 = vmatmul.f32.gmra.mxu0 %v344
        %v1149 = vpop.f32.mrf.mxu0
        %v1150 = vadd.f32 %v1130, %v1149
        %1151 = vdwg.mxu0
        %1152 = vmatpush.msra.mxu0 0.0
        %1153 = vmatpush.msra.mxu0 0.0
        %1154 = vmatpush.msra.mxu0 0.0
        %1155 = vmatpush.msra.mxu0 0.0
        %1156 = vmatpush.msra.mxu0 0.0
        %1157 = vmatpush.msra.mxu0 0.0
        %1158 = vmatpush.msra.mxu0 0.0
        %1159 = vmatpush.msra.mxu0 0.0
        %1160 = vmatpush.msra.mxu0 0.0
        %1161 = vmatpush.msra.mxu0 0.0
        %1162 = vmatpush.msra.mxu0 0.0
        %1163 = vmatpush.msra.mxu0 0.0
        %1164 = vmatpush.msra.mxu0 0.0
        %1165 = vmatpush.msra.mxu0 0.0
        %1166 = vmatpush.msra.mxu0 %v736
        %1167 = vmatpush.msra.mxu0 %v732
        %1168 = vmatmul.f32.gmra.mxu0 %v750
        %v1169 = vpop.f32.mrf.mxu0
        %v1170 = vadd.f32 %v1150, %v1169
        %1171 = vdwg.mxu0
        %1172 = vmatpush.msra.mxu0 %v409
        %1173 = vmatpush.msra.mxu0 %v405
        %1174 = vmatpush.msra.mxu0 %v401
        %1175 = vmatpush.msra.mxu0 %v397
        %1176 = vmatpush.msra.mxu0 %v393
        %1177 = vmatpush.msra.mxu0 %v389
        %1178 = vmatpush.msra.mxu0 %v385
        %1179 = vmatpush.msra.mxu0 %v381
        %1180 = vmatpush.msra.mxu0 %v377
        %1181 = vmatpush.msra.mxu0 %v373
        %1182 = vmatpush.msra.mxu0 %v369
        %1183 = vmatpush.msra.mxu0 %v365
        %1184 = vmatpush.msra.mxu0 %v361
        %1185 = vmatpush.msra.mxu0 %v357
        %1186 = vmatpush.msra.mxu0 %v353
        %1187 = vmatpush.msra.mxu0 %v349
        %1188 = vmatmul.f32.gmra.mxu0 %v339
        %v1189 = vpop.f32.mrf.mxu0
        %v1190 = vadd.f32 %v743, %v1189
        %1191 = vdwg.mxu0
        %1192 = vmatpush.msra.mxu0 %v473
        %1193 = vmatpush.msra.mxu0 %v469
        %1194 = vmatpush.msra.mxu0 %v465
        %1195 = vmatpush.msra.mxu0 %v461
        %1196 = vmatpush.msra.mxu0 %v457
        %1197 = vmatpush.msra.mxu0 %v453
        %1198 = vmatpush.msra.mxu0 %v449
        %1199 = vmatpush.msra.mxu0 %v445
        %1200 = vmatpush.msra.mxu0 %v441
        %1201 = vmatpush.msra.mxu0 %v437
        %1202 = vmatpush.msra.mxu0 %v433
        %1203 = vmatpush.msra.mxu0 %v429
        %1204 = vmatpush.msra.mxu0 %v425
        %1205 = vmatpush.msra.mxu0 %v421
        %1206 = vmatpush.msra.mxu0 %v417
        %1207 = vmatpush.msra.mxu0 %v413
        %1208 = vmatmul.f32.gmra.mxu0 %v340
        %v1209 = vpop.f32.mrf.mxu0
        %v1210 = vadd.f32 %v1190, %v1209
        %1211 = vdwg.mxu0
        %1212 = vmatpush.msra.mxu0 %v537
        %1213 = vmatpush.msra.mxu0 %v533
        %1214 = vmatpush.msra.mxu0 %v529
        %1215 = vmatpush.msra.mxu0 %v525
        %1216 = vmatpush.msra.mxu0 %v521
        %1217 = vmatpush.msra.mxu0 %v517
        %1218 = vmatpush.msra.mxu0 %v513
        %1219 = vmatpush.msra.mxu0 %v509
        %1220 = vmatpush.msra.mxu0 %v505
        %1221 = vmatpush.msra.mxu0 %v501
        %1222 = vmatpush.msra.mxu0 %v497
        %1223 = vmatpush.msra.mxu0 %v493
        %1224 = vmatpush.msra.mxu0 %v489
        %1225 = vmatpush.msra.mxu0 %v485
        %1226 = vmatpush.msra.mxu0 %v481
        %1227 = vmatpush.msra.mxu0 %v477
        %1228 = vmatmul.f32.gmra.mxu0 %v341
        %v1229 = vpop.f32.mrf.mxu0
        %v1230 = vadd.f32 %v1210, %v1229
        %1231 = vdwg.mxu0
        %1232 = vmatpush.msra.mxu0 %v601
        %1233 = vmatpush.msra.mxu0 %v597
        %1234 = vmatpush.msra.mxu0 %v593
        %1235 = vmatpush.msra.mxu0 %v589
        %1236 = vmatpush.msra.mxu0 %v585
        %1237 = vmatpush.msra.mxu0 %v581
        %1238 = vmatpush.msra.mxu0 %v577
        %1239 = vmatpush.msra.mxu0 %v573
        %1240 = vmatpush.msra.mxu0 %v569
        %1241 = vmatpush.msra.mxu0 %v565
        %1242 = vmatpush.msra.mxu0 %v561
        %1243 = vmatpush.msra.mxu0 %v557
        %1244 = vmatpush.msra.mxu0 %v553
        %1245 = vmatpush.msra.mxu0 %v549
        %1246 = vmatpush.msra.mxu0 %v545
        %1247 = vmatpush.msra.mxu0 %v541
        %1248 = vmatmul.f32.gmra.mxu0 %v342
        %v1249 = vpop.f32.mrf.mxu0
        %v1250 = vadd.f32 %v1230, %v1249
        %1251 = vdwg.mxu0
        %1252 = vmatpush.msra.mxu0 %v665
        %1253 = vmatpush.msra.mxu0 %v661
        %1254 = vmatpush.msra.mxu0 %v657
        %1255 = vmatpush.msra.mxu0 %v653
        %1256 = vmatpush.msra.mxu0 %v649
        %1257 = vmatpush.msra.mxu0 %v645
        %1258 = vmatpush.msra.mxu0 %v641
        %1259 = vmatpush.msra.mxu0 %v637
        %1260 = vmatpush.msra.mxu0 %v633
        %1261 = vmatpush.msra.mxu0 %v629
        %1262 = vmatpush.msra.mxu0 %v625
        %1263 = vmatpush.msra.mxu0 %v621
        %1264 = vmatpush.msra.mxu0 %v617
        %1265 = vmatpush.msra.mxu0 %v613
        %1266 = vmatpush.msra.mxu0 %v609
        %1267 = vmatpush.msra.mxu0 %v605
        %1268 = vmatmul.f32.gmra.mxu0 %v343
        %v1269 = vpop.f32.mrf.mxu0
        %v1270 = vadd.f32 %v1250, %v1269
        %1271 = vdwg.mxu0
        %1272 = vmatpush.msra.mxu0 %v729
        %1273 = vmatpush.msra.mxu0 %v725
        %1274 = vmatpush.msra.mxu0 %v721
        %1275 = vmatpush.msra.mxu0 %v717
        %1276 = vmatpush.msra.mxu0 %v713
        %1277 = vmatpush.msra.mxu0 %v709
        %1278 = vmatpush.msra.mxu0 %v705
        %1279 = vmatpush.msra.mxu0 %v701
        %1280 = vmatpush.msra.mxu0 %v697
        %1281 = vmatpush.msra.mxu0 %v693
        %1282 = vmatpush.msra.mxu0 %v689
        %1283 = vmatpush.msra.mxu0 %v685
        %1284 = vmatpush.msra.mxu0 %v681
        %1285 = vmatpush.msra.mxu0 %v677
        %1286 = vmatpush.msra.mxu0 %v673
        %1287 = vmatpush.msra.mxu0 %v669
        %1288 = vmatmul.f32.gmra.mxu0 %v344
        %v1289 = vpop.f32.mrf.mxu0
        %v1290 = vadd.f32 %v1270, %v1289
        %1291 = vdwg.mxu0
        %1292 = vmatpush.msra.mxu0 0.0
        %1293 = vmatpush.msra.mxu0 0.0
        %1294 = vmatpush.msra.mxu0 0.0
        %1295 = vmatpush.msra.mxu0 0.0
        %1296 = vmatpush.msra.mxu0 0.0
        %1297 = vmatpush.msra.mxu0 0.0
        %1298 = vmatpush.msra.mxu0 0.0
        %1299 = vmatpush.msra.mxu0 0.0
        %1300 = vmatpush.msra.mxu0 0.0
        %1301 = vmatpush.msra.mxu0 0.0
        %1302 = vmatpush.msra.mxu0 0.0
        %1303 = vmatpush.msra.mxu0 0.0
        %1304 = vmatpush.msra.mxu0 0.0
        %1305 = vmatpush.msra.mxu0 0.0
        %1306 = vmatpush.msra.mxu0 %v737
        %1307 = vmatpush.msra.mxu0 %v733
        %1308 = vmatmul.f32.gmra.mxu0 %v750
        %v1309 = vpop.f32.mrf.mxu0
        %v1310 = vadd.f32 %v1290, %v1309
        %1311 = vdwg.mxu0
        %v1312 = vld [vmem:[%s288] sm:$0xff]
        %v1313 = vld [vmem:[%s288 + $0x8] sm:$0xff]
        %v1314 = vld [vmem:[%s288 + $0x10] sm:$0xff]
        %v1315 = vld [vmem:[%s288 + $0x18] sm:$0xff]
        %v1316 = vld [vmem:[%s288 + $0x20] sm:$0x3]
        %v1317 = vld [vmem:[%s288 + $0x28] sm:$0x3]
        %v1318 = vld [vmem:[%s288 + $0x30] sm:$0x3]
        %v1319 = vld [vmem:[%s288 + $0x38] sm:$0x3]
        %1320 = vmatpush.xpose.msra.mxu0 0.0
        %1321 = vmatpush.xpose.msra.mxu0 0.0
        %1322 = vmatpush.xpose.msra.mxu0 0.0
        %1323 = vmatpush.xpose.msra.mxu0 0.0
        %1324 = vmatpush.xpose.msra.mxu0 0.0
        %1325 = vmatpush.xpose.msra.mxu0 0.0
        %1326 = vmatpush.xpose.msra.mxu0 0.0
        %1327 = vmatpush.xpose.msra.mxu0 0.0
        %1328 = vmatpush.xpose.msra.mxu0 0.0
        %1329 = vmatpush.xpose.msra.mxu0 0.0
        %1330 = vmatpush.xpose.msra.mxu0 0.0
        %1331 = vmatpush.xpose.msra.mxu0 0.0
        %1332 = vmatpush.xpose.msra.mxu0 0.0
        %1333 = vmatpush.xpose.msra.mxu0 0.0
        %1334 = vmatpush.xpose.msra.mxu0 %v1316
        %1335 = vmatpush.xpose.msra.mxu0 %v1312
        %1336 = vmatmul.f32.gmra.mxu0 %v890
        %v1337 = vpop.f32.mrf.mxu0
        %v1338 = vadd.f32 0.0, %v1337
        %1339 = vdwg.mxu0
        %1340 = vmatpush.xpose.msra.mxu0 0.0
        %1341 = vmatpush.xpose.msra.mxu0 0.0
        %1342 = vmatpush.xpose.msra.mxu0 0.0
        %1343 = vmatpush.xpose.msra.mxu0 0.0
        %1344 = vmatpush.xpose.msra.mxu0 0.0
        %1345 = vmatpush.xpose.msra.mxu0 0.0
        %1346 = vmatpush.xpose.msra.mxu0 0.0
        %1347 = vmatpush.xpose.msra.mxu0 0.0
        %1348 = vmatpush.xpose.msra.mxu0 0.0
        %1349 = vmatpush.xpose.msra.mxu0 0.0
        %1350 = vmatpush.xpose.msra.mxu0 0.0
        %1351 = vmatpush.xpose.msra.mxu0 0.0
        %1352 = vmatpush.xpose.msra.mxu0 0.0
        %1353 = vmatpush.xpose.msra.mxu0 0.0
        %1354 = vmatpush.xpose.msra.mxu0 %v1317
        %1355 = vmatpush.xpose.msra.mxu0 %v1313
        %1356 = vmatmul.f32.gmra.mxu0 %v1030
        %v1357 = vpop.f32.mrf.mxu0
        %v1358 = vadd.f32 %v1338, %v1357
        %1359 = vdwg.mxu0
        %1360 = vmatpush.xpose.msra.mxu0 0.0
        %1361 = vmatpush.xpose.msra.mxu0 0.0
        %1362 = vmatpush.xpose.msra.mxu0 0.0
        %1363 = vmatpush.xpose.msra.mxu0 0.0
        %1364 = vmatpush.xpose.msra.mxu0 0.0
        %1365 = vmatpush.xpose.msra.mxu0 0.0
        %1366 = vmatpush.xpose.msra.mxu0 0.0
        %1367 = vmatpush.xpose.msra.mxu0 0.0
        %1368 = vmatpush.xpose.msra.mxu0 0.0
        %1369 = vmatpush.xpose.msra.mxu0 0.0
        %1370 = vmatpush.xpose.msra.mxu0 0.0
        %1371 = vmatpush.xpose.msra.mxu0 0.0
        %1372 = vmatpush.xpose.msra.mxu0 0.0
        %1373 = vmatpush.xpose.msra.mxu0 0.0
        %1374 = vmatpush.xpose.msra.mxu0 %v1318
        %1375 = vmatpush.xpose.msra.mxu0 %v1314
        %1376 = vmatmul.f32.gmra.mxu0 %v1170
        %v1377 = vpop.f32.mrf.mxu0
        %v1378 = vadd.f32 %v1358, %v1377
        %1379 = vdwg.mxu0
        %1380 = vmatpush.xpose.msra.mxu0 0.0
        %1381 = vmatpush.xpose.msra.mxu0 0.0
        %1382 = vmatpush.xpose.msra.mxu0 0.0
        %1383 = vmatpush.xpose.msra.mxu0 0.0
        %1384 = vmatpush.xpose.msra.mxu0 0.0
        %1385 = vmatpush.xpose.msra.mxu0 0.0
        %1386 = vmatpush.xpose.msra.mxu0 0.0
        %1387 = vmatpush.xpose.msra.mxu0 0.0
        %1388 = vmatpush.xpose.msra.mxu0 0.0
        %1389 = vmatpush.xpose.msra.mxu0 0.0
        %1390 = vmatpush.xpose.msra.mxu0 0.0
        %1391 = vmatpush.xpose.msra.mxu0 0.0
        %1392 = vmatpush.xpose.msra.mxu0 0.0
        %1393 = vmatpush.xpose.msra.mxu0 0.0
        %1394 = vmatpush.xpose.msra.mxu0 %v1319
        %1395 = vmatpush.xpose.msra.mxu0 %v1315
        %1396 = vmatmul.f32.gmra.mxu0 %v1310
        %v1397 = vpop.f32.mrf.mxu0
        %v1398 = vadd.f32 %v1378, %v1397
        %1399 = vdwg.mxu0
        %v1400 = vld [vmem:[#allocation10] sm:$0xff]
        %v1401 = vadd.f32 %v1400, %v1398
        %vm1402 = vcmask 80896
        %1403 = vst.msk [vmem:[#allocation10] sm:$0xff] %vm1402, %v1401
        // Predicated region
        $region61: #{mlp_ds_forward.1} parent=39 // pred_check
          %p1404 = pneg %p157
        $region62: #{mlp_ds_forward.1} parent=39 // pred_check_branch
          %1406 = sbr.rel (%p1404) target = $region64
        $region63: #{mlp_ds_forward.1} parent=39 // pred_region
          %1408 = vsyncadd [#allocation4], 0
          %s1410 = sshll.u32 [#allocation10], 4
          %s1411 = int_to_ptr.vmem [resolvable:$true] %s1410
          %s1412 = sshll.u32 %s5, 4
          %s1413 = int_to_ptr.hbm [resolvable:$true] %s1412
          %1415 = dma.vmem_to_hbm [thread:$0]  %s1411, 128, %s1413, [#allocation4]
        $region64: #{mlp_ds_forward.1} parent=39 // pred_fallthru
          _
        // Predicated region
        $region65: #{mlp_ds_forward.1} parent=39 // pred_check
          %p1416 = pneg %p157
        $region66: #{mlp_ds_forward.1} parent=39 // pred_check_branch
          %1418 = sbr.rel (%p1416) target = $region68
        $region67: #{mlp_ds_forward.1} parent=39 // pred_region
          %1420 = dma.done [#allocation4], 128
        $region68: #{mlp_ds_forward.1} parent=39 // pred_fallthru
          _
      $region40: #{mlp_ds_forward.1} parent=5 // pred_fallthru
        _
      %p1421 = scmp.le.s32.totalorder 2, %s19
      // Predicated region
      $region69: #{mlp_ds_forward.1} parent=5 // pred_check
        %p1422 = pneg %p1421
      $region70: #{mlp_ds_forward.1} parent=5 // pred_check_branch
        %1424 = sbr.rel (%p1422) target = $region72
      $region71: #{mlp_ds_forward.1} parent=5 // pred_region
        %s1425 = ssub.s32 %s19, 2
      $region72: #{mlp_ds_forward.1} parent=5 // pred_fallthru
        _
    $region6: #{mlp_ds_forward.1} parent=1 // loop_footer
      %s23 = sadd.s32 1, %s19
    $region7: #{mlp_ds_forward.1} parent=1 // loop_footer_branch
      %18 = sbr.rel target = $region3
    $region8: #{mlp_ds_forward.1} parent=1 // loop_exit
      _
    %1426 = vsyncpa [#allocation3], 1
    %s1427 = scalar_lea.sflag [#allocation3], 1
    %1428 = vsyncpa %s1427, 1
    %1429 = vsyncpa [#allocation6], 1
    %s1430 = scalar_lea.sflag [#allocation6], 1
    %1431 = vsyncpa %s1430, 1
    %1432 = vsyncpa [#allocation9], 1
    %1433 = vsyncpa [#allocation4], 1
    %s1434 = scalar_lea.sflag [#allocation4], 1
    %1435 = vsyncpa %s1434, 1

</llo_original>
